<compile_context>
chip_gen: v7x
topology: tpu7x:2x2x1
jax: 0.10.0
libtpu: 0.0.40
codegen_flags: <defaults>
</compile_context>

<pallas_src>
import functools
import math

import jax
import jax.numpy as jnp
from jax.experimental import pallas as pl
from jax.experimental.pallas import tpu as pltpu

D = 6          # state dim
M = 6          # control dim
S = 3          # number of accelerations / networks
HID = 64       # hidden width per network
FUSED = S * HID  # 192: fused hidden width across the 3 nets
NHID = 5       # number of layers with tanh (1 input layer + 4 hidden layers)


# --------------------------------------------------------------------------
# Kernel
# --------------------------------------------------------------------------
def _model_kernel(y0_ref, x36_ref,
                  w0_ref, b0_ref,
                  wh_ref, bh_ref,
                  wo_ref, bo_ref,
                  o_ref, *, use_bf16_tanh=False):
    """One batch tile, feature-major.

    y0_ref : (7, TN)      shared input  [U ; theta]^T
    x36_ref: (3, TN)      X[:, 3:6]^T  (velocity pass-through)
    w0_ref : (192, 7)     fused, transposed first-layer weight
    b0_ref : (192, 1)
    wh_ref : (4, 192,192) block-diagonal, transposed hidden weights
    bh_ref : (4, 192, 1)
    wo_ref : (3, 192)     block-diagonal, transposed output head
    bo_ref : (3, 1)
    o_ref  : (6, TN)      dX^T
    """
    def act(z):
        if use_bf16_tanh:
            # EUP bf16 tanh (v6e / v7x); matmul accumulation stays f32.
            return jnp.tanh(z.astype(jnp.bfloat16)).astype(jnp.float32)
        return jnp.tanh(z)

    # fused input layer: (192,7) @ (7,TN) -> (192,TN)
    h = act(jnp.dot(w0_ref[...], y0_ref[...],
                    preferred_element_type=jnp.float32) + b0_ref[...])

    # four fused (block-diagonal) hidden layers: (192,192) @ (192,TN)
    for l in range(NHID - 1):
        h = act(jnp.dot(wh_ref[l], h,
                        preferred_element_type=jnp.float32) + bh_ref[l])

    # fused output head: (3,192) @ (192,TN) -> (3,TN)
    acc = jnp.dot(wo_ref[...], h,
                  preferred_element_type=jnp.float32) + bo_ref[...]

    # dX^T = [ X[:,3:6]^T ; acc ]   -- two direct lane-dense stores
    o_ref[0:S, :] = x36_ref[...]
    o_ref[S:D, :] = acc


# --------------------------------------------------------------------------
# Wrapper
# --------------------------------------------------------------------------
def model_black_simple_forward(X, U, packed, *, tile_n=None,
                               use_bf16_tanh=False):
    """X: (N, 6) f32, U: (N, 6) f32 -> dX: (N, 6) f32."""
    N = X.shape[0]
    if tile_n is None:
        tile_n = 512 if (N % 512 == 0) else N
    assert N % tile_n == 0, "batch must be divisible by tile size"
    assert tile_n == N or tile_n % 128 == 0, \
        "batch tile must be a multiple of 128 (lane axis) or the full batch"

    # Build the shared 7-feature input and the pass-through block in the
    # wrapper (plain XLA), transposed to feature-major.
    Y0T = jnp.concatenate([U, X[:, 2:3]], axis=1).T        # (7, N)
    X36T = X[:, 3:6].T                                      # (3, N)

    w0t, b0, wht, bh, wot, bo = packed
    grid = (N // tile_n,)

    weight_specs = [
        pl.BlockSpec(w0t.shape, lambda i: (0, 0)),
        pl.BlockSpec(b0.shape,  lambda i: (0, 0)),
        pl.BlockSpec(wht.shape, lambda i: (0, 0, 0)),
        pl.BlockSpec(bh.shape,  lambda i: (0, 0, 0)),
        pl.BlockSpec(wot.shape, lambda i: (0, 0)),
        pl.BlockSpec(bo.shape,  lambda i: (0, 0)),
    ]

    kernel = functools.partial(_model_kernel, use_bf16_tanh=use_bf16_tanh)

    outT = pl.pallas_call(
        kernel,
        out_shape=jax.ShapeDtypeStruct((D, N), jnp.float32),
        grid_spec=pltpu.PrefetchScalarGridSpec(
            num_scalar_prefetch=0,
            grid=grid,
            in_specs=[
                pl.BlockSpec((M + 1, tile_n), lambda i: (0, i)),   # Y0^T tile
                pl.BlockSpec((S, tile_n),     lambda i: (0, i)),   # X36^T tile
            ] + weight_specs,
            out_specs=pl.BlockSpec((D, tile_n), lambda i: (0, i)),
        ),
        compiler_params=pltpu.CompilerParams(
            dimension_semantics=("parallel",)),
    )(Y0T, X36T, w0t, b0, wht, bh, wot, bo)

    return outT.T                                           # (N, 6)


# --------------------------------------------------------------------------
# Parameter construction
# --------------------------------------------------------------------------
def _init_linear(key, fan_in, fan_out):
    """Deterministic PyTorch-style uniform init."""
    k_w, k_b = jax.random.split(key)
    bound = 1.0 / math.sqrt(fan_in)
    W = jax.random.uniform(k_w, (fan_in, fan_out), jnp.float32, -bound, bound)
    b = jax.random.uniform(k_b, (fan_out,), jnp.float32, -bound, bound)
    return W, b


def init_params(key):
    """Per-net stacked weights (nnx, nny, nnt) in the 'natural' layout."""
    in_sizes = [M + 1, M + 1, M]          # nnx, nny, nnt
    w_in, b_in, w_hid, b_hid, w_out, b_out = [], [], [], [], [], []
    for n, in_size in enumerate(in_sizes):
        knet = jax.random.fold_in(key, n)
        # layer 0 (zero-pad nnt's first layer from 6 -> 7 inputs; the extra
        # theta column is multiplied by zeros, mathematically identical)
        W0, B0 = _init_linear(jax.random.fold_in(knet, 0), in_size, HID)
        if in_size < M + 1:
            W0 = jnp.concatenate(
                [W0, jnp.zeros((M + 1 - in_size, HID), jnp.float32)], axis=0)
        w_in.append(W0)                    # (7, 64)
        b_in.append(B0.reshape(1, HID))    # (1, 64)
        # hidden layers 1..4
        ws, bs = [], []
        for l in range(1, NHID):
            Wl, Bl = _init_linear(jax.random.fold_in(knet, l), HID, HID)
            ws.append(Wl)
            bs.append(Bl.reshape(1, HID))
        w_hid.append(jnp.stack(ws))        # (4, 64, 64)
        b_hid.append(jnp.stack(bs))        # (4, 1, 64)
        # output head
        Wo, Bo = _init_linear(jax.random.fold_in(knet, NHID), HID, 1)
        w_out.append(Wo)                   # (64, 1)
        b_out.append(Bo.reshape(1, 1))     # (1, 1)
    return (jnp.stack(w_in), jnp.stack(b_in),
            jnp.stack(w_hid), jnp.stack(b_hid),
            jnp.stack(w_out), jnp.stack(b_out))


def _block_diag(blocks):
    rows = sum(b.shape[0] for b in blocks)
    cols = sum(b.shape[1] for b in blocks)
    out = jnp.zeros((rows, cols), blocks[0].dtype)
    r = c = 0
    for b in blocks:
        out = out.at[r:r + b.shape[0], c:c + b.shape[1]].set(b)
        r += b.shape[0]
        c += b.shape[1]
    return out


def pack_params(params):
    """Fuse the 3 nets and transpose for the feature-major kernel."""
    w_in, b_in, w_hid, b_hid, w_out, b_out = params

    # fused first layer: (7, 192) -> transposed (192, 7); bias (192, 1)
    w0t = jnp.concatenate([w_in[s] for s in range(S)], axis=1).T
    b0 = jnp.concatenate([b_in[s] for s in range(S)], axis=1).T

    # block-diagonal hidden layers, transposed: (4, 192, 192); bias (4, 192, 1)
    wht = jnp.stack([
        _block_diag([w_hid[s, l].T for s in range(S)])
        for l in range(NHID - 1)])
    bh = jnp.stack([
        jnp.concatenate([b_hid[s, l] for s in range(S)], axis=1).T
        for l in range(NHID - 1)])

    # block-diagonal output head, transposed: (3, 192); bias (3, 1)
    wot = _block_diag([w_out[s].T for s in range(S)])
    bo = jnp.concatenate([b_out[s] for s in range(S)], axis=0)

    return (w0t, b0, wht, bh, wot, bo)


# --------------------------------------------------------------------------
# Pure-JAX reference (unfused, mirrors the PyTorch forward)
# --------------------------------------------------------------------------
def reference_forward(X, U, params):
    w_in, b_in, w_hid, b_hid, w_out, b_out = params
    Y0 = jnp.concatenate([U, X[:, 2:3]], axis=1)
    accs = []
    for s in range(S):
        h = jnp.tanh(Y0 @ w_in[s] + b_in[s])
        for l in range(NHID - 1):
            h = jnp.tanh(h @ w_hid[s, l] + b_hid[s, l])
        accs.append(h @ w_out[s] + b_out[s])
    return jnp.concatenate([X[:, 3:6]] + accs, axis=1)


if __name__ == "__main__":
    key = jax.random.PRNGKey(0)
    k_x, k_u, k_p = jax.random.split(key, 3)

    N = 256                                 # small batch; 2 grid steps of 128
    X = jax.random.normal(k_x, (N, D), jnp.float32)
    U = jax.random.normal(k_u, (N, M), jnp.float32)

    params = init_params(k_p)
    packed = pack_params(params)

    out = model_black_simple_forward(X, U, packed, tile_n=128)
    out = jax.block_until_ready(out)

    ref = reference_forward(X, U, params)
    assert out.shape == (N, D)
    assert jnp.allclose(out, ref, atol=1e-4, rtol=1e-4), "mismatch vs reference"

    print("KERNEL_OK")
</pallas_src>

<mosaic_0001>
module attributes {stable_mosaic.version = 11 : i64} {
  func.func @_model_kernel(%arg0: i32, %arg1: memref<7x128xf32, #tpu.memory_space<vmem>>, %arg2: memref<3x128xf32, #tpu.memory_space<vmem>>, %arg3: memref<192x7xf32, #tpu.memory_space<vmem>>, %arg4: memref<192x1xf32, #tpu.memory_space<vmem>>, %arg5: memref<4x192x192xf32, #tpu.memory_space<vmem>>, %arg6: memref<4x192x1xf32, #tpu.memory_space<vmem>>, %arg7: memref<3x192xf32, #tpu.memory_space<vmem>>, %arg8: memref<3x1xf32, #tpu.memory_space<vmem>>, %arg9: memref<6x128xf32, #tpu.memory_space<vmem>>) attributes {dimension_semantics = [#tpu.dimension_semantics<parallel>], iteration_bounds = array<i64: 2>, scalar_prefetch = 0 : i64, scratch_operands = 0 : i64, tpu.core_type = #tpu.core_type<tc>, window_params = [{transform_indices = @transform_0, window_bounds = array<i64: 7, 128>}, {transform_indices = @transform_1, window_bounds = array<i64: 3, 128>}, {pipeline_mode = #tpu.pipeline_mode<synchronous>, transform_indices = @transform_2, window_bounds = array<i64: 192, 7>}, {pipeline_mode = #tpu.pipeline_mode<synchronous>, transform_indices = @transform_3, window_bounds = array<i64: 192, 1>}, {pipeline_mode = #tpu.pipeline_mode<synchronous>, transform_indices = @transform_4, window_bounds = array<i64: 4, 192, 192>}, {pipeline_mode = #tpu.pipeline_mode<synchronous>, transform_indices = @transform_5, window_bounds = array<i64: 4, 192, 1>}, {pipeline_mode = #tpu.pipeline_mode<synchronous>, transform_indices = @transform_6, window_bounds = array<i64: 3, 192>}, {pipeline_mode = #tpu.pipeline_mode<synchronous>, transform_indices = @transform_7, window_bounds = array<i64: 3, 1>}, {transform_indices = @transform_8, window_bounds = array<i64: 6, 128>}]} {
    %c0 = arith.constant 0 : index
    %c0_0 = arith.constant 0 : index
    %0 = vector.load %arg3[%c0, %c0_0] : memref<192x7xf32, #tpu.memory_space<vmem>>, vector<192x7xf32>
    %c0_1 = arith.constant 0 : index
    %c0_2 = arith.constant 0 : index
    %1 = vector.load %arg1[%c0_1, %c0_2] : memref<7x128xf32, #tpu.memory_space<vmem>>, vector<7x128xf32>
    %cst = arith.constant dense<0.000000e+00> : vector<192x128xf32>
    %2 = tpu.matmul %0, %1, %cst {dimension_numbers = #tpu.dot_dimension_numbers<[1], [0], [0], [1], [0, 0, 1, 1], [], []>} : vector<192x7xf32>, vector<7x128xf32>, vector<192x128xf32> -> vector<192x128xf32>
    %c0_3 = arith.constant 0 : index
    %c0_4 = arith.constant 0 : index
    %3 = vector.load %arg4[%c0_3, %c0_4] : memref<192x1xf32, #tpu.memory_space<vmem>>, vector<192x1xf32>
    %4 = vector.broadcast %3 : vector<192x1xf32> to vector<192x128xf32>
    %5 = arith.addf %2, %4 : vector<192x128xf32>
    %6 = math.tanh %5 : vector<192x128xf32>
    %c0_5 = arith.constant 0 : index
    %c0_6 = arith.constant 0 : index
    %c0_7 = arith.constant 0 : index
    %7 = vector.load %arg5[%c0_5, %c0_6, %c0_7] : memref<4x192x192xf32, #tpu.memory_space<vmem>>, vector<1x192x192xf32>
    %8 = vector.shape_cast %7 : vector<1x192x192xf32> to vector<192x192xf32>
    %cst_8 = arith.constant dense<0.000000e+00> : vector<192x128xf32>
    %9 = tpu.matmul %8, %6, %cst_8 {dimension_numbers = #tpu.dot_dimension_numbers<[1], [0], [0], [1], [0, 0, 1, 1], [], []>} : vector<192x192xf32>, vector<192x128xf32>, vector<192x128xf32> -> vector<192x128xf32>
    %c0_9 = arith.constant 0 : index
    %c0_10 = arith.constant 0 : index
    %c0_11 = arith.constant 0 : index
    %10 = vector.load %arg6[%c0_9, %c0_10, %c0_11] : memref<4x192x1xf32, #tpu.memory_space<vmem>>, vector<1x192x1xf32>
    %11 = vector.shape_cast %10 : vector<1x192x1xf32> to vector<192x1xf32>
    %12 = vector.broadcast %11 : vector<192x1xf32> to vector<192x128xf32>
    %13 = arith.addf %9, %12 : vector<192x128xf32>
    %14 = math.tanh %13 : vector<192x128xf32>
    %c1 = arith.constant 1 : index
    %c0_12 = arith.constant 0 : index
    %c0_13 = arith.constant 0 : index
    %15 = vector.load %arg5[%c1, %c0_12, %c0_13] : memref<4x192x192xf32, #tpu.memory_space<vmem>>, vector<1x192x192xf32>
    %16 = vector.shape_cast %15 : vector<1x192x192xf32> to vector<192x192xf32>
    %cst_14 = arith.constant dense<0.000000e+00> : vector<192x128xf32>
    %17 = tpu.matmul %16, %14, %cst_14 {dimension_numbers = #tpu.dot_dimension_numbers<[1], [0], [0], [1], [0, 0, 1, 1], [], []>} : vector<192x192xf32>, vector<192x128xf32>, vector<192x128xf32> -> vector<192x128xf32>
    %c1_15 = arith.constant 1 : index
    %c0_16 = arith.constant 0 : index
    %c0_17 = arith.constant 0 : index
    %18 = vector.load %arg6[%c1_15, %c0_16, %c0_17] : memref<4x192x1xf32, #tpu.memory_space<vmem>>, vector<1x192x1xf32>
    %19 = vector.shape_cast %18 : vector<1x192x1xf32> to vector<192x1xf32>
    %20 = vector.broadcast %19 : vector<192x1xf32> to vector<192x128xf32>
    %21 = arith.addf %17, %20 : vector<192x128xf32>
    %22 = math.tanh %21 : vector<192x128xf32>
    %c2 = arith.constant 2 : index
    %c0_18 = arith.constant 0 : index
    %c0_19 = arith.constant 0 : index
    %23 = vector.load %arg5[%c2, %c0_18, %c0_19] : memref<4x192x192xf32, #tpu.memory_space<vmem>>, vector<1x192x192xf32>
    %24 = vector.shape_cast %23 : vector<1x192x192xf32> to vector<192x192xf32>
    %cst_20 = arith.constant dense<0.000000e+00> : vector<192x128xf32>
    %25 = tpu.matmul %24, %22, %cst_20 {dimension_numbers = #tpu.dot_dimension_numbers<[1], [0], [0], [1], [0, 0, 1, 1], [], []>} : vector<192x192xf32>, vector<192x128xf32>, vector<192x128xf32> -> vector<192x128xf32>
    %c2_21 = arith.constant 2 : index
    %c0_22 = arith.constant 0 : index
    %c0_23 = arith.constant 0 : index
    %26 = vector.load %arg6[%c2_21, %c0_22, %c0_23] : memref<4x192x1xf32, #tpu.memory_space<vmem>>, vector<1x192x1xf32>
    %27 = vector.shape_cast %26 : vector<1x192x1xf32> to vector<192x1xf32>
    %28 = vector.broadcast %27 : vector<192x1xf32> to vector<192x128xf32>
    %29 = arith.addf %25, %28 : vector<192x128xf32>
    %30 = math.tanh %29 : vector<192x128xf32>
    %c3 = arith.constant 3 : index
    %c0_24 = arith.constant 0 : index
    %c0_25 = arith.constant 0 : index
    %31 = vector.load %arg5[%c3, %c0_24, %c0_25] : memref<4x192x192xf32, #tpu.memory_space<vmem>>, vector<1x192x192xf32>
    %32 = vector.shape_cast %31 : vector<1x192x192xf32> to vector<192x192xf32>
    %cst_26 = arith.constant dense<0.000000e+00> : vector<192x128xf32>
    %33 = tpu.matmul %32, %30, %cst_26 {dimension_numbers = #tpu.dot_dimension_numbers<[1], [0], [0], [1], [0, 0, 1, 1], [], []>} : vector<192x192xf32>, vector<192x128xf32>, vector<192x128xf32> -> vector<192x128xf32>
    %c3_27 = arith.constant 3 : index
    %c0_28 = arith.constant 0 : index
    %c0_29 = arith.constant 0 : index
    %34 = vector.load %arg6[%c3_27, %c0_28, %c0_29] : memref<4x192x1xf32, #tpu.memory_space<vmem>>, vector<1x192x1xf32>
    %35 = vector.shape_cast %34 : vector<1x192x1xf32> to vector<192x1xf32>
    %36 = vector.broadcast %35 : vector<192x1xf32> to vector<192x128xf32>
    %37 = arith.addf %33, %36 : vector<192x128xf32>
    %38 = math.tanh %37 : vector<192x128xf32>
    %c0_30 = arith.constant 0 : index
    %c0_31 = arith.constant 0 : index
    %39 = vector.load %arg7[%c0_30, %c0_31] : memref<3x192xf32, #tpu.memory_space<vmem>>, vector<3x192xf32>
    %cst_32 = arith.constant dense<0.000000e+00> : vector<3x128xf32>
    %40 = tpu.matmul %39, %38, %cst_32 {dimension_numbers = #tpu.dot_dimension_numbers<[1], [0], [0], [1], [0, 0, 1, 1], [], []>} : vector<3x192xf32>, vector<192x128xf32>, vector<3x128xf32> -> vector<3x128xf32>
    %c0_33 = arith.constant 0 : index
    %c0_34 = arith.constant 0 : index
    %41 = vector.load %arg8[%c0_33, %c0_34] : memref<3x1xf32, #tpu.memory_space<vmem>>, vector<3x1xf32>
    %42 = vector.broadcast %41 : vector<3x1xf32> to vector<3x128xf32>
    %43 = arith.addf %40, %42 : vector<3x128xf32>
    %c0_35 = arith.constant 0 : index
    %c0_36 = arith.constant 0 : index
    %44 = vector.load %arg2[%c0_35, %c0_36] : memref<3x128xf32, #tpu.memory_space<vmem>>, vector<3x128xf32>
    %c0_37 = arith.constant 0 : index
    %c0_38 = arith.constant 0 : index
    %45 = vector.load %arg9[%c0_37, %c0_38] : memref<6x128xf32, #tpu.memory_space<vmem>>, vector<3x128xf32>
    tpu.vector_store %arg9[%c0_37, %c0_38], %44 {strides = array<i32>} : memref<6x128xf32, #tpu.memory_space<vmem>>, vector<3x128xf32>,
    %c3_39 = arith.constant 3 : index
    %c0_40 = arith.constant 0 : index
    %46 = vector.load %arg9[%c3_39, %c0_40] : memref<6x128xf32, #tpu.memory_space<vmem>>, vector<3x128xf32>
    tpu.vector_store %arg9[%c3_39, %c0_40], %43 {strides = array<i32>} : memref<6x128xf32, #tpu.memory_space<vmem>>, vector<3x128xf32>,
    return
  }
  func.func @transform_0(%arg0: i32) -> (i32, i32) {
    %c0_i32 = arith.constant 0 : i32
    %c0_i32_0 = arith.constant 0 : i32
    return %c0_i32, %arg0 : i32, i32
  }
  func.func @transform_1(%arg0: i32) -> (i32, i32) {
    %c0_i32 = arith.constant 0 : i32
    %c0_i32_0 = arith.constant 0 : i32
    return %c0_i32, %arg0 : i32, i32
  }
  func.func @transform_2(%arg0: i32) -> (i32, i32) {
    %c0_i32 = arith.constant 0 : i32
    %c0_i32_0 = arith.constant 0 : i32
    %c0_i32_1 = arith.constant 0 : i32
    return %c0_i32, %c0_i32_0 : i32, i32
  }
  func.func @transform_3(%arg0: i32) -> (i32, i32) {
    %c0_i32 = arith.constant 0 : i32
    %c0_i32_0 = arith.constant 0 : i32
    %c0_i32_1 = arith.constant 0 : i32
    return %c0_i32, %c0_i32_0 : i32, i32
  }
  func.func @transform_4(%arg0: i32) -> (i32, i32, i32) {
    %c0_i32 = arith.constant 0 : i32
    %c0_i32_0 = arith.constant 0 : i32
    %c0_i32_1 = arith.constant 0 : i32
    %c0_i32_2 = arith.constant 0 : i32
    return %c0_i32, %c0_i32_0, %c0_i32_1 : i32, i32, i32
  }
  func.func @transform_5(%arg0: i32) -> (i32, i32, i32) {
    %c0_i32 = arith.constant 0 : i32
    %c0_i32_0 = arith.constant 0 : i32
    %c0_i32_1 = arith.constant 0 : i32
    %c0_i32_2 = arith.constant 0 : i32
    return %c0_i32, %c0_i32_0, %c0_i32_1 : i32, i32, i32
  }
  func.func @transform_6(%arg0: i32) -> (i32, i32) {
    %c0_i32 = arith.constant 0 : i32
    %c0_i32_0 = arith.constant 0 : i32
    %c0_i32_1 = arith.constant 0 : i32
    return %c0_i32, %c0_i32_0 : i32, i32
  }
  func.func @transform_7(%arg0: i32) -> (i32, i32) {
    %c0_i32 = arith.constant 0 : i32
    %c0_i32_0 = arith.constant 0 : i32
    %c0_i32_1 = arith.constant 0 : i32
    return %c0_i32, %c0_i32_0 : i32, i32
  }
  func.func @transform_8(%arg0: i32) -> (i32, i32) {
    %c0_i32 = arith.constant 0 : i32
    %c0_i32_0 = arith.constant 0 : i32
    return %c0_i32, %arg0 : i32, i32
  }
}

</mosaic_0001>

<llo_original>
// kernel: tpu_custom_call.1
$region0: #{tpu_custom_call.1}
  #allocation0 [shape = 'u32[]', space=smem, size = 0x4, offset = 0x4, fixed_abs, tag = 'smem constant byte address 0x4 - core index']
  #allocation1 [shape = 'u32[144,128]{1,0:T(1,128)}', space=vmem, size = 0x12000, scoped, tag = 'internal scratch']
  %s0 = inlined_call_operand.vmem [shape: f32[7,256], index: 0, kind: input, shape index: {}]
  %s1 = inlined_call_operand.vmem [shape: f32[3,256], index: 1, kind: input, shape index: {}]
  %s2 = inlined_call_operand.vmem [shape: f32[192,7], index: 2, kind: input, shape index: {}]
  %s3 = inlined_call_operand.vmem [shape: f32[192,1], index: 3, kind: input, shape index: {}]
  %s4 = inlined_call_operand.hbm [shape: f32[4,192,192], index: 4, kind: input, shape index: {}]
  %s5 = inlined_call_operand.vmem [shape: f32[4,192,1], index: 5, kind: input, shape index: {}]
  %s6 = inlined_call_operand.vmem [shape: f32[3,192], index: 6, kind: input, shape index: {}]
  %s7 = inlined_call_operand.vmem [shape: f32[3,1], index: 7, kind: input, shape index: {}]
  %s8 = inlined_call_operand.hbm [shape: f32[6,256], index: 8, kind: output, shape index: {}]
  %s9 = sld [smem:[#allocation0]]
  $region69: #{tpu_custom_call.1} parent=0
    _
  %s11 = ssub.s32 1, %s9
  %s12 = scalar_select 0, %s11, %s9
  $region1: #{tpu_custom_call.1} parent=0
    #allocation2 [shape = 'u8[786432]{0}', space=vmem, size = 0xc0000, scoped, tag = 'input window, operand 4, single buffered']
    #allocation3 [shape = 's32[2]{0}', space=sflag, size = 0x8, scoped, tag = 'scoped memory for tpu_custom_call.1']
    #allocation4 [shape = 's32[2]{0}', space=sflag, size = 0x8, scoped, tag = 'scoped memory for tpu_custom_call.1']
    #allocation5 [shape = 'u8[8192]{0}', space=vmem, size = 0x2000, scoped, tag = 'output window, operand 0']
    %13 = vsyncpa [#allocation3], 0
    %14 = vsyncpa [#allocation4], 0
    %s15 = scalar_lea.sflag [#allocation4], 1
    %16 = vsyncpa %s15, 0
    loop: start=0, step=1, limit=4
    $region2: #{tpu_custom_call.1} parent=1 // loop_pre_header
      _
    $region3: #{tpu_custom_call.1} parent=1 // loop_header
      %s18 = sphi 0, %s22
      %p19 = scmp.ge.s32.totalorder %s18, 4
      %s28 = sphi 0, %s30
      %s31 = sphi 0, %s28
      %s32 = sphi 0, %s31
      %s48 = sphi 0, %s32
      %s54 = sphi 0, %s56
      %s57 = sphi 0, %s54
      %s58 = sphi 0, %s57
      %s74 = sphi 0, %s58
      %s78 = sphi 0, %s78
      %s80 = sphi 0, %s78
      %s81 = sphi 0, %s80
      %s95 = sphi 0, %s81
      %s99 = sphi 0, %s99
      %s101 = sphi 0, %s99
      %s102 = sphi 0, %s101
      %s116 = sphi 0, %s102
      %s120 = sphi 0, %s120
      %s122 = sphi 0, %s120
      %s123 = sphi 0, %s122
      %s137 = sphi 0, %s123
      %s141 = sphi 0, %s141
      %s143 = sphi 0, %s141
      %s144 = sphi 0, %s143
      %s158 = sphi 0, %s144
      %s162 = sphi 0, %s162
      %s164 = sphi 0, %s162
      %s165 = sphi 0, %s164
      %s179 = sphi 0, %s165
      %s183 = sphi 0, %s183
      %s185 = sphi 0, %s183
      %s186 = sphi 0, %s185
      %s200 = sphi 0, %s186
      %s206 = sphi 0, %s208
      %s209 = sphi 0, %s206
      %s210 = sphi 0, %s209
      %s226 = sphi 0, %s210
    $region4: #{tpu_custom_call.1} parent=1 // loop_header_branch
      %21 = sbr.rel (%p19) target = $region8
    $region5: #{tpu_custom_call.1} parent=1 // loop_body
      %s23 = ssub.s32 %s18, 1
      %s24 = ssub.s32 %s18, 2
      %s25 = sadd.s32 %s18, 1
      %s26 = ssub.s32 %s18, %s25
      %p27 = scmp.eq.s32.totalorder %s26, 0
      %s29 = sadd.s32 %s28, 1
      %s30 = scalar_select %p27, %s28, %s29
      %p33 = pneg %p27
      %p34 = scmp.eq.s32.totalorder %s18, 1
      %p35 = por %p33, %p34
      %p36 = scmp.ne.s32.totalorder %s28, %s31
      %p37 = scmp.eq.s32.totalorder %s18, 0
      %p38 = por %p36, %p37
      %p39 = scmp.ne.s32.totalorder %s28, %s31
      %p40 = scmp.eq.s32.totalorder %s23, 1
      %p41 = por %p39, %p40
      %p42 = scmp.ne.s32.totalorder %s31, %s32
      %p43 = scmp.eq.s32.totalorder %s23, 0
      %p44 = por %p42, %p43
      %p45 = scmp.ne.s32.totalorder %s31, %s32
      %p46 = scmp.eq.s32.totalorder %s24, 1
      %p47 = por %p45, %p46
      %p49 = scmp.ne.s32.totalorder %s32, %s48
      %p50 = scmp.eq.s32.totalorder %s24, 0
      %p51 = por %p49, %p50
      %s52 = ssub.s32 %s18, %s25
      %p53 = scmp.eq.s32.totalorder %s52, 0
      %s55 = sadd.s32 %s54, 1
      %s56 = scalar_select %p53, %s54, %s55
      %p59 = pneg %p53
      %p60 = scmp.eq.s32.totalorder %s18, 1
      %p61 = por %p59, %p60
      %p62 = scmp.ne.s32.totalorder %s54, %s57
      %p63 = scmp.eq.s32.totalorder %s18, 0
      %p64 = por %p62, %p63
      %p65 = scmp.ne.s32.totalorder %s54, %s57
      %p66 = scmp.eq.s32.totalorder %s23, 1
      %p67 = por %p65, %p66
      %p68 = scmp.ne.s32.totalorder %s57, %s58
      %p69 = scmp.eq.s32.totalorder %s23, 0
      %p70 = por %p68, %p69
      %p71 = scmp.ne.s32.totalorder %s57, %s58
      %p72 = scmp.eq.s32.totalorder %s24, 1
      %p73 = por %p71, %p72
      %p75 = scmp.ne.s32.totalorder %s58, %s74
      %p76 = scmp.eq.s32.totalorder %s24, 0
      %p77 = por %p75, %p76
      %s79 = sadd.s32 %s78, 1
      %p82 = scmp.eq.s32.totalorder %s18, 1
      %p83 = scmp.ne.s32.totalorder %s78, %s80
      %p84 = scmp.eq.s32.totalorder %s18, 0
      %p85 = por %p83, %p84
      %p86 = scmp.ne.s32.totalorder %s78, %s80
      %p87 = scmp.eq.s32.totalorder %s23, 1
      %p88 = por %p86, %p87
      %p89 = scmp.ne.s32.totalorder %s80, %s81
      %p90 = scmp.eq.s32.totalorder %s23, 0
      %p91 = por %p89, %p90
      %p92 = scmp.ne.s32.totalorder %s80, %s81
      %p93 = scmp.eq.s32.totalorder %s24, 1
      %p94 = por %p92, %p93
      %p96 = scmp.ne.s32.totalorder %s81, %s95
      %p97 = scmp.eq.s32.totalorder %s24, 0
      %p98 = por %p96, %p97
      %s100 = sadd.s32 %s99, 1
      %p103 = scmp.eq.s32.totalorder %s18, 1
      %p104 = scmp.ne.s32.totalorder %s99, %s101
      %p105 = scmp.eq.s32.totalorder %s18, 0
      %p106 = por %p104, %p105
      %p107 = scmp.ne.s32.totalorder %s99, %s101
      %p108 = scmp.eq.s32.totalorder %s23, 1
      %p109 = por %p107, %p108
      %p110 = scmp.ne.s32.totalorder %s101, %s102
      %p111 = scmp.eq.s32.totalorder %s23, 0
      %p112 = por %p110, %p111
      %p113 = scmp.ne.s32.totalorder %s101, %s102
      %p114 = scmp.eq.s32.totalorder %s24, 1
      %p115 = por %p113, %p114
      %p117 = scmp.ne.s32.totalorder %s102, %s116
      %p118 = scmp.eq.s32.totalorder %s24, 0
      %p119 = por %p117, %p118
      %s121 = sadd.s32 %s120, 1
      %p124 = scmp.eq.s32.totalorder %s18, 1
      %p125 = scmp.ne.s32.totalorder %s120, %s122
      %p126 = scmp.eq.s32.totalorder %s18, 0
      %p127 = por %p125, %p126
      %p128 = scmp.ne.s32.totalorder %s120, %s122
      %p129 = scmp.eq.s32.totalorder %s23, 1
      %p130 = por %p128, %p129
      %p131 = scmp.ne.s32.totalorder %s122, %s123
      %p132 = scmp.eq.s32.totalorder %s23, 0
      %p133 = por %p131, %p132
      %p134 = scmp.ne.s32.totalorder %s122, %s123
      %p135 = scmp.eq.s32.totalorder %s24, 1
      %p136 = por %p134, %p135
      %p138 = scmp.ne.s32.totalorder %s123, %s137
      %p139 = scmp.eq.s32.totalorder %s24, 0
      %p140 = por %p138, %p139
      %s142 = sadd.s32 %s141, 1
      %p145 = scmp.eq.s32.totalorder %s18, 1
      %p146 = scmp.ne.s32.totalorder %s141, %s143
      %p147 = scmp.eq.s32.totalorder %s18, 0
      %p148 = por %p146, %p147
      %p149 = scmp.ne.s32.totalorder %s141, %s143
      %p150 = scmp.eq.s32.totalorder %s23, 1
      %p151 = por %p149, %p150
      %p152 = scmp.ne.s32.totalorder %s143, %s144
      %p153 = scmp.eq.s32.totalorder %s23, 0
      %p154 = por %p152, %p153
      %p155 = scmp.ne.s32.totalorder %s143, %s144
      %p156 = scmp.eq.s32.totalorder %s24, 1
      %p157 = por %p155, %p156
      %p159 = scmp.ne.s32.totalorder %s144, %s158
      %p160 = scmp.eq.s32.totalorder %s24, 0
      %p161 = por %p159, %p160
      %s163 = sadd.s32 %s162, 1
      %p166 = scmp.eq.s32.totalorder %s18, 1
      %p167 = scmp.ne.s32.totalorder %s162, %s164
      %p168 = scmp.eq.s32.totalorder %s18, 0
      %p169 = por %p167, %p168
      %p170 = scmp.ne.s32.totalorder %s162, %s164
      %p171 = scmp.eq.s32.totalorder %s23, 1
      %p172 = por %p170, %p171
      %p173 = scmp.ne.s32.totalorder %s164, %s165
      %p174 = scmp.eq.s32.totalorder %s23, 0
      %p175 = por %p173, %p174
      %p176 = scmp.ne.s32.totalorder %s164, %s165
      %p177 = scmp.eq.s32.totalorder %s24, 1
      %p178 = por %p176, %p177
      %p180 = scmp.ne.s32.totalorder %s165, %s179
      %p181 = scmp.eq.s32.totalorder %s24, 0
      %p182 = por %p180, %p181
      %s184 = sadd.s32 %s183, 1
      %p187 = scmp.eq.s32.totalorder %s18, 1
      %p188 = scmp.ne.s32.totalorder %s183, %s185
      %p189 = scmp.eq.s32.totalorder %s18, 0
      %p190 = por %p188, %p189
      %p191 = scmp.ne.s32.totalorder %s183, %s185
      %p192 = scmp.eq.s32.totalorder %s23, 1
      %p193 = por %p191, %p192
      %p194 = scmp.ne.s32.totalorder %s185, %s186
      %p195 = scmp.eq.s32.totalorder %s23, 0
      %p196 = por %p194, %p195
      %p197 = scmp.ne.s32.totalorder %s185, %s186
      %p198 = scmp.eq.s32.totalorder %s24, 1
      %p199 = por %p197, %p198
      %p201 = scmp.ne.s32.totalorder %s186, %s200
      %p202 = scmp.eq.s32.totalorder %s24, 0
      %p203 = por %p201, %p202
      %s204 = ssub.s32 %s18, %s25
      %p205 = scmp.eq.s32.totalorder %s204, 0
      %s207 = sadd.s32 %s206, 1
      %s208 = scalar_select %p205, %s206, %s207
      %p211 = pneg %p205
      %p212 = scmp.eq.s32.totalorder %s18, 1
      %p213 = por %p211, %p212
      %p214 = scmp.ne.s32.totalorder %s206, %s209
      %p215 = scmp.eq.s32.totalorder %s18, 0
      %p216 = por %p214, %p215
      %p217 = scmp.ne.s32.totalorder %s206, %s209
      %p218 = scmp.eq.s32.totalorder %s23, 1
      %p219 = por %p217, %p218
      %p220 = scmp.ne.s32.totalorder %s209, %s210
      %p221 = scmp.eq.s32.totalorder %s23, 0
      %p222 = por %p220, %p221
      %p223 = scmp.ne.s32.totalorder %s209, %s210
      %p224 = scmp.eq.s32.totalorder %s24, 1
      %p225 = por %p223, %p224
      %p227 = scmp.ne.s32.totalorder %s210, %s226
      %p228 = scmp.eq.s32.totalorder %s24, 0
      %p229 = por %p227, %p228
      %p230 = scmp.le.s32.totalorder 1, %s18
      %p231 = scmp.lt.s32.totalorder %s18, 3
      %p232 = pnand %p230, %p231
      %p233 = pneg %p232
      // Predicated region
      $region9: #{tpu_custom_call.1} parent=5 // pred_check
        _
      $region10: #{tpu_custom_call.1} parent=5 // pred_check_branch
        %235 = sbr.rel (%p232) target = $region12
      $region11: #{tpu_custom_call.1} parent=5 // pred_region
        %s236 = ssub.s32 %s18, 1
        // Predicated region
        $region13: #{tpu_custom_call.1} parent=11 // pred_check
          %p237 = pneg %p91
        $region14: #{tpu_custom_call.1} parent=11 // pred_check_branch
          %239 = sbr.rel (%p237) target = $region16
        $region15: #{tpu_custom_call.1} parent=11 // pred_region
          _
        $region16: #{tpu_custom_call.1} parent=11 // pred_fallthru
          _
        // Predicated region
        $region17: #{tpu_custom_call.1} parent=11 // pred_check
          %p240 = pneg %p112
        $region18: #{tpu_custom_call.1} parent=11 // pred_check_branch
          %242 = sbr.rel (%p240) target = $region20
        $region19: #{tpu_custom_call.1} parent=11 // pred_region
          _
        $region20: #{tpu_custom_call.1} parent=11 // pred_fallthru
          _
        // Predicated region
        $region21: #{tpu_custom_call.1} parent=11 // pred_check
          %p243 = pneg %p133
        $region22: #{tpu_custom_call.1} parent=11 // pred_check_branch
          %245 = sbr.rel (%p243) target = $region24
        $region23: #{tpu_custom_call.1} parent=11 // pred_region
          %s247 = ssub.s32 24576, 24576
          %248 = vsyncadd [#allocation3], %s247
          %s249 = sshll.u32 [#allocation2], 4
          %s250 = int_to_ptr.vmem [resolvable:$true] %s249
          %255 = dma.hbm_to_vmem [thread:$0]  %s4, 24576, %s250, [#allocation3], 256, 256, 16
        $region24: #{tpu_custom_call.1} parent=11 // pred_fallthru
          _
        // Predicated region
        $region25: #{tpu_custom_call.1} parent=11 // pred_check
          %p256 = pneg %p154
        $region26: #{tpu_custom_call.1} parent=11 // pred_check_branch
          %258 = sbr.rel (%p256) target = $region28
        $region27: #{tpu_custom_call.1} parent=11 // pred_region
          _
        $region28: #{tpu_custom_call.1} parent=11 // pred_fallthru
          _
        // Predicated region
        $region29: #{tpu_custom_call.1} parent=11 // pred_check
          %p259 = pneg %p175
        $region30: #{tpu_custom_call.1} parent=11 // pred_check_branch
          %261 = sbr.rel (%p259) target = $region32
        $region31: #{tpu_custom_call.1} parent=11 // pred_region
          _
        $region32: #{tpu_custom_call.1} parent=11 // pred_fallthru
          _
        // Predicated region
        $region33: #{tpu_custom_call.1} parent=11 // pred_check
          %p262 = pneg %p196
        $region34: #{tpu_custom_call.1} parent=11 // pred_check_branch
          %264 = sbr.rel (%p262) target = $region36
        $region35: #{tpu_custom_call.1} parent=11 // pred_region
          _
        $region36: #{tpu_custom_call.1} parent=11 // pred_fallthru
          _
      $region12: #{tpu_custom_call.1} parent=5 // pred_fallthru
        _
      %p265 = scmp.lt.s32.totalorder %s18, 2
      // Predicated region
      $region37: #{tpu_custom_call.1} parent=5 // pred_check
        %p266 = pneg %p265
      $region38: #{tpu_custom_call.1} parent=5 // pred_check_branch
        %268 = sbr.rel (%p266) target = $region40
      $region39: #{tpu_custom_call.1} parent=5 // pred_region
        // Predicated region
        $region41: #{tpu_custom_call.1} parent=39 // pred_check
          %p269 = pneg %p38
        $region42: #{tpu_custom_call.1} parent=39 // pred_check_branch
          %271 = sbr.rel (%p269) target = $region44
        $region43: #{tpu_custom_call.1} parent=39 // pred_region
          %p272 = scmp.lt.s32.totalorder %s18, 1
          %s273 = scalar_select %p272, %s18, 1
          %s274 = smul.addr %s273, 8
          %s275 = scalar_lea.vmem %s0, %s274
        $region44: #{tpu_custom_call.1} parent=39 // pred_fallthru
          _
        // Predicated region
        $region45: #{tpu_custom_call.1} parent=39 // pred_check
          %p276 = pneg %p64
        $region46: #{tpu_custom_call.1} parent=39 // pred_check_branch
          %278 = sbr.rel (%p276) target = $region48
        $region47: #{tpu_custom_call.1} parent=39 // pred_region
          %p279 = scmp.lt.s32.totalorder %s18, 1
          %s280 = scalar_select %p279, %s18, 1
          %s281 = smul.addr %s280, 4
          %s282 = scalar_lea.vmem %s1, %s281
        $region48: #{tpu_custom_call.1} parent=39 // pred_fallthru
          _
      $region40: #{tpu_custom_call.1} parent=5 // pred_fallthru
        _
      %p283 = scmp.le.s32.totalorder 1, %s18
      %p284 = scmp.lt.s32.totalorder %s18, 3
      %p285 = pnand %p283, %p284
      %p286 = pneg %p285
      // Predicated region
      $region49: #{tpu_custom_call.1} parent=5 // pred_check
        _
      $region50: #{tpu_custom_call.1} parent=5 // pred_check_branch
        %288 = sbr.rel (%p285) target = $region52
      $region51: #{tpu_custom_call.1} parent=5 // pred_region
        %s289 = ssub.s32 %s18, 1
        // Predicated region
        $region53: #{tpu_custom_call.1} parent=51 // pred_check
          %p290 = pneg %p133
        $region54: #{tpu_custom_call.1} parent=51 // pred_check_branch
          %292 = sbr.rel (%p290) target = $region56
        $region55: #{tpu_custom_call.1} parent=51 // pred_region
          %293 = dma.done [#allocation3], 24576
        $region56: #{tpu_custom_call.1} parent=51 // pred_fallthru
          _
        %p294 = scmp.lt.s32.totalorder %s23, 1
        %s295 = scalar_select %p294, %s23, 1
        %s296 = smul.addr %s295, 8
        %s297 = scalar_lea.vmem %s0, %s296
        %p298 = pneg %p44
        %p299 = pneg %p41
        %p300 = scmp.lt.s32.totalorder %s23, 1
        %s301 = scalar_select %p300, %s23, 1
        %s302 = smul.addr %s301, 4
        %s303 = scalar_lea.vmem %s1, %s302
        %p304 = pneg %p70
        %p305 = pneg %p67
        %p306 = pneg %p91
        %p307 = pneg %p88
        %p308 = pneg %p112
        %p309 = pneg %p109
        %p310 = pneg %p133
        %p311 = pneg %p130
        %p312 = pneg %p154
        %p313 = pneg %p151
        %p314 = pneg %p175
        %p315 = pneg %p172
        %p316 = pneg %p196
        %p317 = pneg %p193
        %p318 = pneg %p222
        %p319 = pneg %p219
        %s320 = sand.u32 %s209, 1
        %s321 = scalar_lea.sflag [#allocation4], %s320
        %s322 = sand.u32 %s209, 1
        %s323 = smul.addr %s322, 8
        %s324 = scalar_lea.vmem [#allocation5], %s323
        %p325 = scmp.lt.s32.totalorder %s23, 1
        %s326 = scalar_select %p325, %s23, 1
        %s327 = smul.addr %s326, 8
        %s328 = scalar_lea.vmem %s0, %s327
        %p329 = scmp.lt.s32.totalorder %s23, 1
        %s330 = scalar_select %p329, %s23, 1
        %s331 = smul.addr %s330, 4
        %s332 = scalar_lea.vmem %s1, %s331
        %v333 = vld [vmem:[%s2] sm:$0xff]
        %v334 = vld [vmem:[%s2 + $0x8] sm:$0xff]
        %v335 = vld [vmem:[%s2 + $0x10] sm:$0xff]
        %v336 = vld [vmem:[%s2 + $0x18] sm:$0xff]
        %v337 = vld [vmem:[%s2 + $0x20] sm:$0xff]
        %v338 = vld [vmem:[%s2 + $0x28] sm:$0xff]
        %v339 = vld [vmem:[%s2 + $0x30] sm:$0xff]
        %v340 = vld [vmem:[%s2 + $0x38] sm:$0xff]
        %v341 = vld [vmem:[%s2 + $0x40] sm:$0xff]
        %v342 = vld [vmem:[%s2 + $0x48] sm:$0xff]
        %v343 = vld [vmem:[%s2 + $0x50] sm:$0xff]
        %v344 = vld [vmem:[%s2 + $0x58] sm:$0xff]
        %v345 = vld [vmem:[%s2 + $0x60] sm:$0xff]
        %v346 = vld [vmem:[%s2 + $0x68] sm:$0xff]
        %v347 = vld [vmem:[%s2 + $0x70] sm:$0xff]
        %v348 = vld [vmem:[%s2 + $0x78] sm:$0xff]
        %v349 = vld [vmem:[%s2 + $0x80] sm:$0xff]
        %v350 = vld [vmem:[%s2 + $0x88] sm:$0xff]
        %v351 = vld [vmem:[%s2 + $0x90] sm:$0xff]
        %v352 = vld [vmem:[%s2 + $0x98] sm:$0xff]
        %v353 = vld [vmem:[%s2 + $0xa0] sm:$0xff]
        %v354 = vld [vmem:[%s2 + $0xa8] sm:$0xff]
        %v355 = vld [vmem:[%s2 + $0xb0] sm:$0xff]
        %v356 = vld [vmem:[%s2 + $0xb8] sm:$0xff]
        %v357 = vld [vmem:[%s328] sm:$0x7f]
        %v358 = vld [vmem:[%s3] sm:$0xff]
        %v359 = vld [vmem:[%s3 + $0x8] sm:$0xff]
        %v360 = vld [vmem:[%s3 + $0x10] sm:$0xff]
        %v361 = vld [vmem:[%s3 + $0x18] sm:$0xff]
        %v362 = vld [vmem:[%s3 + $0x20] sm:$0xff]
        %v363 = vld [vmem:[%s3 + $0x28] sm:$0xff]
        %v364 = vld [vmem:[%s3 + $0x30] sm:$0xff]
        %v365 = vld [vmem:[%s3 + $0x38] sm:$0xff]
        %v366 = vld [vmem:[%s3 + $0x40] sm:$0xff]
        %v367 = vld [vmem:[%s3 + $0x48] sm:$0xff]
        %v368 = vld [vmem:[%s3 + $0x50] sm:$0xff]
        %v369 = vld [vmem:[%s3 + $0x58] sm:$0xff]
        %v370 = vld [vmem:[%s3 + $0x60] sm:$0xff]
        %v371 = vld [vmem:[%s3 + $0x68] sm:$0xff]
        %v372 = vld [vmem:[%s3 + $0x70] sm:$0xff]
        %v373 = vld [vmem:[%s3 + $0x78] sm:$0xff]
        %v374 = vld [vmem:[%s3 + $0x80] sm:$0xff]
        %v375 = vld [vmem:[%s3 + $0x88] sm:$0xff]
        %v376 = vld [vmem:[%s3 + $0x90] sm:$0xff]
        %v377 = vld [vmem:[%s3 + $0x98] sm:$0xff]
        %v378 = vld [vmem:[%s3 + $0xa0] sm:$0xff]
        %v379 = vld [vmem:[%s3 + $0xa8] sm:$0xff]
        %v380 = vld [vmem:[%s3 + $0xb0] sm:$0xff]
        %v381 = vld [vmem:[%s3 + $0xb8] sm:$0xff]
        %383 = vset.pattern.permute.xlu0 0
        %384 = vperm.xlu0 %383, %v358
        %v385 = vpop.permute.xlu0 %384
        %388 = vset.pattern.permute.xlu0 0
        %389 = vperm.xlu0 %388, %v359
        %v390 = vpop.permute.xlu0 %389
        %393 = vset.pattern.permute.xlu0 0
        %394 = vperm.xlu0 %393, %v360
        %v395 = vpop.permute.xlu0 %394
        %398 = vset.pattern.permute.xlu0 0
        %399 = vperm.xlu0 %398, %v361
        %v400 = vpop.permute.xlu0 %399
        %403 = vset.pattern.permute.xlu0 0
        %404 = vperm.xlu0 %403, %v362
        %v405 = vpop.permute.xlu0 %404
        %408 = vset.pattern.permute.xlu0 0
        %409 = vperm.xlu0 %408, %v363
        %v410 = vpop.permute.xlu0 %409
        %413 = vset.pattern.permute.xlu0 0
        %414 = vperm.xlu0 %413, %v364
        %v415 = vpop.permute.xlu0 %414
        %418 = vset.pattern.permute.xlu0 0
        %419 = vperm.xlu0 %418, %v365
        %v420 = vpop.permute.xlu0 %419
        %423 = vset.pattern.permute.xlu0 0
        %424 = vperm.xlu0 %423, %v366
        %v425 = vpop.permute.xlu0 %424
        %428 = vset.pattern.permute.xlu0 0
        %429 = vperm.xlu0 %428, %v367
        %v430 = vpop.permute.xlu0 %429
        %433 = vset.pattern.permute.xlu0 0
        %434 = vperm.xlu0 %433, %v368
        %v435 = vpop.permute.xlu0 %434
        %438 = vset.pattern.permute.xlu0 0
        %439 = vperm.xlu0 %438, %v369
        %v440 = vpop.permute.xlu0 %439
        %443 = vset.pattern.permute.xlu0 0
        %444 = vperm.xlu0 %443, %v370
        %v445 = vpop.permute.xlu0 %444
        %448 = vset.pattern.permute.xlu0 0
        %449 = vperm.xlu0 %448, %v371
        %v450 = vpop.permute.xlu0 %449
        %453 = vset.pattern.permute.xlu0 0
        %454 = vperm.xlu0 %453, %v372
        %v455 = vpop.permute.xlu0 %454
        %458 = vset.pattern.permute.xlu0 0
        %459 = vperm.xlu0 %458, %v373
        %v460 = vpop.permute.xlu0 %459
        %463 = vset.pattern.permute.xlu0 0
        %464 = vperm.xlu0 %463, %v374
        %v465 = vpop.permute.xlu0 %464
        %468 = vset.pattern.permute.xlu0 0
        %469 = vperm.xlu0 %468, %v375
        %v470 = vpop.permute.xlu0 %469
        %473 = vset.pattern.permute.xlu0 0
        %474 = vperm.xlu0 %473, %v376
        %v475 = vpop.permute.xlu0 %474
        %478 = vset.pattern.permute.xlu0 0
        %479 = vperm.xlu0 %478, %v377
        %v480 = vpop.permute.xlu0 %479
        %483 = vset.pattern.permute.xlu0 0
        %484 = vperm.xlu0 %483, %v378
        %v485 = vpop.permute.xlu0 %484
        %488 = vset.pattern.permute.xlu0 0
        %489 = vperm.xlu0 %488, %v379
        %v490 = vpop.permute.xlu0 %489
        %493 = vset.pattern.permute.xlu0 0
        %494 = vperm.xlu0 %493, %v380
        %v495 = vpop.permute.xlu0 %494
        %498 = vset.pattern.permute.xlu0 0
        %499 = vperm.xlu0 %498, %v381
        %v500 = vpop.permute.xlu0 %499
        %vm502 = vcmask 56320
        %v504 = vsel %vm502, %v333, 0
        %v507 = vsel %vm502, %v334, 0
        %v510 = vsel %vm502, %v335, 0
        %v513 = vsel %vm502, %v336, 0
        %v516 = vsel %vm502, %v337, 0
        %v519 = vsel %vm502, %v338, 0
        %v522 = vsel %vm502, %v339, 0
        %v525 = vsel %vm502, %v340, 0
        %v528 = vsel %vm502, %v341, 0
        %v531 = vsel %vm502, %v342, 0
        %v534 = vsel %vm502, %v343, 0
        %v537 = vsel %vm502, %v344, 0
        %v540 = vsel %vm502, %v345, 0
        %v543 = vsel %vm502, %v346, 0
        %v546 = vsel %vm502, %v347, 0
        %v549 = vsel %vm502, %v348, 0
        %v552 = vsel %vm502, %v349, 0
        %v555 = vsel %vm502, %v350, 0
        %v558 = vsel %vm502, %v351, 0
        %v561 = vsel %vm502, %v352, 0
        %v564 = vsel %vm502, %v353, 0
        %v567 = vsel %vm502, %v354, 0
        %v570 = vsel %vm502, %v355, 0
        %v573 = vsel %vm502, %v356, 0
        %vm575 = vcmask 1046528
        %v577 = vsel %vm575, %v357, 0
        %579 = vmatprep.subr.mxu0 0.0
        %580 = vmatpush1.msra.mxu0 %v577
        %581 = vmatprep.subr.mxu0 0.0
        %582 = vmatpush1.msra.mxu0 0.0
        %583 = vmatprep.subr.mxu0 0.0
        %584 = vmatpush1.msra.mxu0 0.0
        %585 = vmatprep.subr.mxu0 0.0
        %586 = vmatpush1.msra.mxu0 0.0
        %587 = vmatprep.subr.mxu0 0.0
        %588 = vmatpush1.msra.mxu0 0.0
        %589 = vmatprep.subr.mxu0 0.0
        %590 = vmatpush1.msra.mxu0 0.0
        %591 = vmatprep.subr.mxu0 0.0
        %592 = vmatpush1.msra.mxu0 0.0
        %593 = vmatprep.subr.mxu0 0.0
        %594 = vmatpush1.msra.mxu0 0.0
        %595 = vmatprep.subr.mxu0 0.0
        %596 = vmatpush1.msra.mxu0 0.0
        %597 = vmatprep.subr.mxu0 0.0
        %598 = vmatpush1.msra.mxu0 0.0
        %599 = vmatprep.subr.mxu0 0.0
        %600 = vmatpush1.msra.mxu0 0.0
        %601 = vmatprep.subr.mxu0 0.0
        %602 = vmatpush1.msra.mxu0 0.0
        %603 = vmatprep.subr.mxu0 0.0
        %604 = vmatpush1.msra.mxu0 0.0
        %605 = vmatprep.subr.mxu0 0.0
        %606 = vmatpush1.msra.mxu0 0.0
        %607 = vmatprep.subr.mxu0 0.0
        %608 = vmatpush1.msra.mxu0 0.0
        %609 = vmatprep.subr.mxu0 0.0
        %610 = vmatpush1.msra.mxu0 0.0
        %611 = vmatprep.subr.mxu0 0.0
        %612 = vmatpush1.msra.mxu0 0.0
        %613 = vmatprep.subr.mxu0 0.0
        %614 = vmatpush1.msra.mxu0 0.0
        %615 = vmatprep.subr.mxu0 0.0
        %616 = vmatpush1.msra.mxu0 0.0
        %617 = vmatprep.subr.mxu0 0.0
        %618 = vmatpush1.msra.mxu0 0.0
        %619 = vmatprep.subr.mxu0 0.0
        %620 = vmatpush1.msra.mxu0 0.0
        %621 = vmatprep.subr.mxu0 0.0
        %622 = vmatpush1.msra.mxu0 0.0
        %623 = vmatprep.subr.mxu0 0.0
        %624 = vmatpush1.msra.mxu0 0.0
        %625 = vmatprep.subr.mxu0 0.0
        %626 = vmatpush1.msra.mxu0 0.0
        %627 = vmatprep.subr.mxu0 0.0
        %628 = vmatpush1.msra.mxu0 0.0
        %629 = vmatprep.subr.mxu0 0.0
        %630 = vmatpush1.msra.mxu0 0.0
        %631 = vmatprep.subr.mxu0 0.0
        %632 = vmatpush1.msra.mxu0 0.0
        %633 = vmatprep.subr.mxu0 0.0
        %634 = vmatpush1.msra.mxu0 0.0
        %635 = vmatprep.subr.mxu0 0.0
        %636 = vmatpush1.msra.mxu0 0.0
        %637 = vmatprep.subr.mxu0 0.0
        %638 = vmatpush1.msra.mxu0 0.0
        %639 = vmatprep.subr.mxu0 0.0
        %640 = vmatpush1.msra.mxu0 0.0
        %641 = vmatprep.subr.mxu0 0.0
        %642 = vmatpush1.msra.mxu0 0.0
        %643 = vmatprep.mubr.f32.mxu0 0.0
        %644 = vmatmul.mubr.f32.gmra.mrb[0].mxu0 %v504
        %v645 = vpop.f32.mrb[0].mxu0
        %v646 = vadd.f32 %v385, %v645
        %v647 = vpop.f32.mrb[0].mxu0
        %648 = vmatprep.mubr.f32.mxu0 0.0
        %649 = vmatmul.mubr.f32.gmra.mrb[0].mxu0 %v507
        %v650 = vpop.f32.mrb[0].mxu0
        %v651 = vadd.f32 %v390, %v650
        %v652 = vpop.f32.mrb[0].mxu0
        %653 = vmatprep.mubr.f32.mxu0 0.0
        %654 = vmatmul.mubr.f32.gmra.mrb[0].mxu0 %v510
        %v655 = vpop.f32.mrb[0].mxu0
        %v656 = vadd.f32 %v395, %v655
        %v657 = vpop.f32.mrb[0].mxu0
        %658 = vmatprep.mubr.f32.mxu0 0.0
        %659 = vmatmul.mubr.f32.gmra.mrb[0].mxu0 %v513
        %v660 = vpop.f32.mrb[0].mxu0
        %v661 = vadd.f32 %v400, %v660
        %v662 = vpop.f32.mrb[0].mxu0
        %663 = vmatprep.mubr.f32.mxu0 0.0
        %664 = vmatmul.mubr.f32.gmra.mrb[0].mxu0 %v516
        %v665 = vpop.f32.mrb[0].mxu0
        %v666 = vadd.f32 %v405, %v665
        %v667 = vpop.f32.mrb[0].mxu0
        %668 = vmatprep.mubr.f32.mxu0 0.0
        %669 = vmatmul.mubr.f32.gmra.mrb[0].mxu0 %v519
        %v670 = vpop.f32.mrb[0].mxu0
        %v671 = vadd.f32 %v410, %v670
        %v672 = vpop.f32.mrb[0].mxu0
        %673 = vmatprep.mubr.f32.mxu0 0.0
        %674 = vmatmul.mubr.f32.gmra.mrb[0].mxu0 %v522
        %v675 = vpop.f32.mrb[0].mxu0
        %v676 = vadd.f32 %v415, %v675
        %v677 = vpop.f32.mrb[0].mxu0
        %678 = vmatprep.mubr.f32.mxu0 0.0
        %679 = vmatmul.mubr.f32.gmra.mrb[0].mxu0 %v525
        %v680 = vpop.f32.mrb[0].mxu0
        %v681 = vadd.f32 %v420, %v680
        %v682 = vpop.f32.mrb[0].mxu0
        %683 = vmatprep.mubr.f32.mxu0 0.0
        %684 = vmatmul.mubr.f32.gmra.mrb[0].mxu0 %v528
        %v685 = vpop.f32.mrb[0].mxu0
        %v686 = vadd.f32 %v425, %v685
        %v687 = vpop.f32.mrb[0].mxu0
        %688 = vmatprep.mubr.f32.mxu0 0.0
        %689 = vmatmul.mubr.f32.gmra.mrb[0].mxu0 %v531
        %v690 = vpop.f32.mrb[0].mxu0
        %v691 = vadd.f32 %v430, %v690
        %v692 = vpop.f32.mrb[0].mxu0
        %693 = vmatprep.mubr.f32.mxu0 0.0
        %694 = vmatmul.mubr.f32.gmra.mrb[0].mxu0 %v534
        %v695 = vpop.f32.mrb[0].mxu0
        %v696 = vadd.f32 %v435, %v695
        %v697 = vpop.f32.mrb[0].mxu0
        %698 = vmatprep.mubr.f32.mxu0 0.0
        %699 = vmatmul.mubr.f32.gmra.mrb[0].mxu0 %v537
        %v700 = vpop.f32.mrb[0].mxu0
        %v701 = vadd.f32 %v440, %v700
        %v702 = vpop.f32.mrb[0].mxu0
        %703 = vmatprep.mubr.f32.mxu0 0.0
        %704 = vmatmul.mubr.f32.gmra.mrb[0].mxu0 %v540
        %v705 = vpop.f32.mrb[0].mxu0
        %v706 = vadd.f32 %v445, %v705
        %v707 = vpop.f32.mrb[0].mxu0
        %708 = vmatprep.mubr.f32.mxu0 0.0
        %709 = vmatmul.mubr.f32.gmra.mrb[0].mxu0 %v543
        %v710 = vpop.f32.mrb[0].mxu0
        %v711 = vadd.f32 %v450, %v710
        %v712 = vpop.f32.mrb[0].mxu0
        %713 = vmatprep.mubr.f32.mxu0 0.0
        %714 = vmatmul.mubr.f32.gmra.mrb[0].mxu0 %v546
        %v715 = vpop.f32.mrb[0].mxu0
        %v716 = vadd.f32 %v455, %v715
        %v717 = vpop.f32.mrb[0].mxu0
        %718 = vmatprep.mubr.f32.mxu0 0.0
        %719 = vmatmul.mubr.f32.gmra.mrb[0].mxu0 %v549
        %v720 = vpop.f32.mrb[0].mxu0
        %v721 = vadd.f32 %v460, %v720
        %v722 = vpop.f32.mrb[0].mxu0
        %723 = vmatprep.mubr.f32.mxu0 0.0
        %724 = vmatmul.mubr.f32.gmra.mrb[0].mxu0 %v552
        %v725 = vpop.f32.mrb[0].mxu0
        %v726 = vadd.f32 %v465, %v725
        %v727 = vpop.f32.mrb[0].mxu0
        %728 = vmatprep.mubr.f32.mxu0 0.0
        %729 = vmatmul.mubr.f32.gmra.mrb[0].mxu0 %v555
        %v730 = vpop.f32.mrb[0].mxu0
        %v731 = vadd.f32 %v470, %v730
        %v732 = vpop.f32.mrb[0].mxu0
        %733 = vmatprep.mubr.f32.mxu0 0.0
        %734 = vmatmul.mubr.f32.gmra.mrb[0].mxu0 %v558
        %v735 = vpop.f32.mrb[0].mxu0
        %v736 = vadd.f32 %v475, %v735
        %v737 = vpop.f32.mrb[0].mxu0
        %738 = vmatprep.mubr.f32.mxu0 0.0
        %739 = vmatmul.mubr.f32.gmra.mrb[0].mxu0 %v561
        %v740 = vpop.f32.mrb[0].mxu0
        %v741 = vadd.f32 %v480, %v740
        %v742 = vpop.f32.mrb[0].mxu0
        %743 = vmatprep.mubr.f32.mxu0 0.0
        %744 = vmatmul.mubr.f32.gmra.mrb[0].mxu0 %v564
        %v745 = vpop.f32.mrb[0].mxu0
        %v746 = vadd.f32 %v485, %v745
        %v747 = vpop.f32.mrb[0].mxu0
        %748 = vmatprep.mubr.f32.mxu0 0.0
        %749 = vmatmul.mubr.f32.gmra.mrb[0].mxu0 %v567
        %v750 = vpop.f32.mrb[0].mxu0
        %v751 = vadd.f32 %v490, %v750
        %v752 = vpop.f32.mrb[0].mxu0
        %753 = vmatprep.mubr.f32.mxu0 0.0
        %754 = vmatmul.mubr.f32.gmra.mrb[0].mxu0 %v570
        %v755 = vpop.f32.mrb[0].mxu0
        %v756 = vadd.f32 %v495, %v755
        %v757 = vpop.f32.mrb[0].mxu0
        %758 = vmatprep.mubr.f32.mxu0 0.0
        %759 = vmatmul.mubr.f32.gmra.mrb[0].mxu0 %v573
        %v760 = vpop.f32.mrb[0].mxu0
        %v761 = vadd.f32 %v500, %v760
        %v762 = vpop.f32.mrb[0].mxu0
        %763 = vdwg.mxu0
        %v764 = vtanh.pop %v646
        %v765 = vtanh.pop %v651
        %v766 = vtanh.pop %v656
        %v767 = vtanh.pop %v661
        %v768 = vtanh.pop %v666
        %v769 = vtanh.pop %v671
        %v770 = vtanh.pop %v676
        %v771 = vtanh.pop %v681
        %v772 = vtanh.pop %v686
        %v773 = vtanh.pop %v691
        %v774 = vtanh.pop %v696
        %v775 = vtanh.pop %v701
        %v776 = vtanh.pop %v706
        %v777 = vtanh.pop %v711
        %v778 = vtanh.pop %v716
        %v779 = vtanh.pop %v721
        %v780 = vtanh.pop %v726
        %v781 = vtanh.pop %v731
        %v782 = vtanh.pop %v736
        %v783 = vtanh.pop %v741
        %v784 = vtanh.pop %v746
        %v785 = vtanh.pop %v751
        %v786 = vtanh.pop %v756
        %v787 = vtanh.pop %v761
        %v788 = vld [vmem:[#allocation2] sm:$0xff]
        %v789 = vld [vmem:[#allocation2 + $0x8] sm:$0xff]
        %v790 = vld [vmem:[#allocation2 + $0x10] sm:$0xff]
        %v791 = vld [vmem:[#allocation2 + $0x18] sm:$0xff]
        %v792 = vld [vmem:[#allocation2 + $0x20] sm:$0xff]
        %v793 = vld [vmem:[#allocation2 + $0x28] sm:$0xff]
        %v794 = vld [vmem:[#allocation2 + $0x30] sm:$0xff]
        %v795 = vld [vmem:[#allocation2 + $0x38] sm:$0xff]
        %v796 = vld [vmem:[#allocation2 + $0x40] sm:$0xff]
        %v797 = vld [vmem:[#allocation2 + $0x48] sm:$0xff]
        %v798 = vld [vmem:[#allocation2 + $0x50] sm:$0xff]
        %v799 = vld [vmem:[#allocation2 + $0x58] sm:$0xff]
        %v800 = vld [vmem:[#allocation2 + $0x60] sm:$0xff]
        %v801 = vld [vmem:[#allocation2 + $0x68] sm:$0xff]
        %v802 = vld [vmem:[#allocation2 + $0x70] sm:$0xff]
        %v803 = vld [vmem:[#allocation2 + $0x78] sm:$0xff]
        %v804 = vld [vmem:[#allocation2 + $0x80] sm:$0xff]
        %v805 = vld [vmem:[#allocation2 + $0x88] sm:$0xff]
        %v806 = vld [vmem:[#allocation2 + $0x90] sm:$0xff]
        %v807 = vld [vmem:[#allocation2 + $0x98] sm:$0xff]
        %v808 = vld [vmem:[#allocation2 + $0xa0] sm:$0xff]
        %v809 = vld [vmem:[#allocation2 + $0xa8] sm:$0xff]
        %v810 = vld [vmem:[#allocation2 + $0xb0] sm:$0xff]
        %v811 = vld [vmem:[#allocation2 + $0xb8] sm:$0xff]
        %v812 = vld [vmem:[#allocation2 + $0xc0] sm:$0xff]
        %v813 = vld [vmem:[#allocation2 + $0xc8] sm:$0xff]
        %v814 = vld [vmem:[#allocation2 + $0xd0] sm:$0xff]
        %v815 = vld [vmem:[#allocation2 + $0xd8] sm:$0xff]
        %v816 = vld [vmem:[#allocation2 + $0xe0] sm:$0xff]
        %v817 = vld [vmem:[#allocation2 + $0xe8] sm:$0xff]
        %v818 = vld [vmem:[#allocation2 + $0xf0] sm:$0xff]
        %v819 = vld [vmem:[#allocation2 + $0xf8] sm:$0xff]
        %v820 = vld [vmem:[#allocation2 + $0x100] sm:$0xff]
        %v821 = vld [vmem:[#allocation2 + $0x108] sm:$0xff]
        %v822 = vld [vmem:[#allocation2 + $0x110] sm:$0xff]
        %v823 = vld [vmem:[#allocation2 + $0x118] sm:$0xff]
        %v824 = vld [vmem:[#allocation2 + $0x120] sm:$0xff]
        %v825 = vld [vmem:[#allocation2 + $0x128] sm:$0xff]
        %v826 = vld [vmem:[#allocation2 + $0x130] sm:$0xff]
        %v827 = vld [vmem:[#allocation2 + $0x138] sm:$0xff]
        %v828 = vld [vmem:[#allocation2 + $0x140] sm:$0xff]
        %v829 = vld [vmem:[#allocation2 + $0x148] sm:$0xff]
        %v830 = vld [vmem:[#allocation2 + $0x150] sm:$0xff]
        %v831 = vld [vmem:[#allocation2 + $0x158] sm:$0xff]
        %v832 = vld [vmem:[#allocation2 + $0x160] sm:$0xff]
        %v833 = vld [vmem:[#allocation2 + $0x168] sm:$0xff]
        %v834 = vld [vmem:[#allocation2 + $0x170] sm:$0xff]
        %v835 = vld [vmem:[#allocation2 + $0x178] sm:$0xff]
        %v836 = vld [vmem:[%s5] sm:$0xff]
        %v837 = vld [vmem:[%s5 + $0x8] sm:$0xff]
        %v838 = vld [vmem:[%s5 + $0x10] sm:$0xff]
        %v839 = vld [vmem:[%s5 + $0x18] sm:$0xff]
        %v840 = vld [vmem:[%s5 + $0x20] sm:$0xff]
        %v841 = vld [vmem:[%s5 + $0x28] sm:$0xff]
        %v842 = vld [vmem:[%s5 + $0x30] sm:$0xff]
        %v843 = vld [vmem:[%s5 + $0x38] sm:$0xff]
        %v844 = vld [vmem:[%s5 + $0x40] sm:$0xff]
        %v845 = vld [vmem:[%s5 + $0x48] sm:$0xff]
        %v846 = vld [vmem:[%s5 + $0x50] sm:$0xff]
        %v847 = vld [vmem:[%s5 + $0x58] sm:$0xff]
        %v848 = vld [vmem:[%s5 + $0x60] sm:$0xff]
        %v849 = vld [vmem:[%s5 + $0x68] sm:$0xff]
        %v850 = vld [vmem:[%s5 + $0x70] sm:$0xff]
        %v851 = vld [vmem:[%s5 + $0x78] sm:$0xff]
        %v852 = vld [vmem:[%s5 + $0x80] sm:$0xff]
        %v853 = vld [vmem:[%s5 + $0x88] sm:$0xff]
        %v854 = vld [vmem:[%s5 + $0x90] sm:$0xff]
        %v855 = vld [vmem:[%s5 + $0x98] sm:$0xff]
        %v856 = vld [vmem:[%s5 + $0xa0] sm:$0xff]
        %v857 = vld [vmem:[%s5 + $0xa8] sm:$0xff]
        %v858 = vld [vmem:[%s5 + $0xb0] sm:$0xff]
        %v859 = vld [vmem:[%s5 + $0xb8] sm:$0xff]
        %861 = vset.pattern.permute.xlu0 0
        %862 = vperm.xlu0 %861, %v836
        %v863 = vpop.permute.xlu0 %862
        %866 = vset.pattern.permute.xlu0 0
        %867 = vperm.xlu0 %866, %v837
        %v868 = vpop.permute.xlu0 %867
        %871 = vset.pattern.permute.xlu0 0
        %872 = vperm.xlu0 %871, %v838
        %v873 = vpop.permute.xlu0 %872
        %876 = vset.pattern.permute.xlu0 0
        %877 = vperm.xlu0 %876, %v839
        %v878 = vpop.permute.xlu0 %877
        %881 = vset.pattern.permute.xlu0 0
        %882 = vperm.xlu0 %881, %v840
        %v883 = vpop.permute.xlu0 %882
        %886 = vset.pattern.permute.xlu0 0
        %887 = vperm.xlu0 %886, %v841
        %v888 = vpop.permute.xlu0 %887
        %891 = vset.pattern.permute.xlu0 0
        %892 = vperm.xlu0 %891, %v842
        %v893 = vpop.permute.xlu0 %892
        %896 = vset.pattern.permute.xlu0 0
        %897 = vperm.xlu0 %896, %v843
        %v898 = vpop.permute.xlu0 %897
        %901 = vset.pattern.permute.xlu0 0
        %902 = vperm.xlu0 %901, %v844
        %v903 = vpop.permute.xlu0 %902
        %906 = vset.pattern.permute.xlu0 0
        %907 = vperm.xlu0 %906, %v845
        %v908 = vpop.permute.xlu0 %907
        %911 = vset.pattern.permute.xlu0 0
        %912 = vperm.xlu0 %911, %v846
        %v913 = vpop.permute.xlu0 %912
        %916 = vset.pattern.permute.xlu0 0
        %917 = vperm.xlu0 %916, %v847
        %v918 = vpop.permute.xlu0 %917
        %921 = vset.pattern.permute.xlu0 0
        %922 = vperm.xlu0 %921, %v848
        %v923 = vpop.permute.xlu0 %922
        %926 = vset.pattern.permute.xlu0 0
        %927 = vperm.xlu0 %926, %v849
        %v928 = vpop.permute.xlu0 %927
        %931 = vset.pattern.permute.xlu0 0
        %932 = vperm.xlu0 %931, %v850
        %v933 = vpop.permute.xlu0 %932
        %936 = vset.pattern.permute.xlu0 0
        %937 = vperm.xlu0 %936, %v851
        %v938 = vpop.permute.xlu0 %937
        %941 = vset.pattern.permute.xlu0 0
        %942 = vperm.xlu0 %941, %v852
        %v943 = vpop.permute.xlu0 %942
        %946 = vset.pattern.permute.xlu0 0
        %947 = vperm.xlu0 %946, %v853
        %v948 = vpop.permute.xlu0 %947
        %951 = vset.pattern.permute.xlu0 0
        %952 = vperm.xlu0 %951, %v854
        %v953 = vpop.permute.xlu0 %952
        %956 = vset.pattern.permute.xlu0 0
        %957 = vperm.xlu0 %956, %v855
        %v958 = vpop.permute.xlu0 %957
        %961 = vset.pattern.permute.xlu0 0
        %962 = vperm.xlu0 %961, %v856
        %v963 = vpop.permute.xlu0 %962
        %966 = vset.pattern.permute.xlu0 0
        %967 = vperm.xlu0 %966, %v857
        %v968 = vpop.permute.xlu0 %967
        %971 = vset.pattern.permute.xlu0 0
        %972 = vperm.xlu0 %971, %v858
        %v973 = vpop.permute.xlu0 %972
        %976 = vset.pattern.permute.xlu0 0
        %977 = vperm.xlu0 %976, %v859
        %v978 = vpop.permute.xlu0 %977
        %vm980 = vcmask 523264
        %v982 = vsel %vm980, %v789, 0
        %v985 = vsel %vm980, %v791, 0
        %v988 = vsel %vm980, %v793, 0
        %v991 = vsel %vm980, %v795, 0
        %v994 = vsel %vm980, %v797, 0
        %v997 = vsel %vm980, %v799, 0
        %v1000 = vsel %vm980, %v801, 0
        %v1003 = vsel %vm980, %v803, 0
        %v1006 = vsel %vm980, %v805, 0
        %v1009 = vsel %vm980, %v807, 0
        %v1012 = vsel %vm980, %v809, 0
        %v1015 = vsel %vm980, %v811, 0
        %v1018 = vsel %vm980, %v813, 0
        %v1021 = vsel %vm980, %v815, 0
        %v1024 = vsel %vm980, %v817, 0
        %v1027 = vsel %vm980, %v819, 0
        %v1030 = vsel %vm980, %v821, 0
        %v1033 = vsel %vm980, %v823, 0
        %v1036 = vsel %vm980, %v825, 0
        %v1039 = vsel %vm980, %v827, 0
        %v1042 = vsel %vm980, %v829, 0
        %v1045 = vsel %vm980, %v831, 0
        %v1048 = vsel %vm980, %v833, 0
        %v1051 = vsel %vm980, %v835, 0
        %1053 = vmatprep.subr.mxu0 0.0
        %1054 = vmatpush1.msra.mxu0 %v764
        %1055 = vmatprep.subr.mxu0 0.0
        %1056 = vmatpush1.msra.mxu0 %v765
        %1057 = vmatprep.subr.mxu0 0.0
        %1058 = vmatpush1.msra.mxu0 %v766
        %1059 = vmatprep.subr.mxu0 0.0
        %1060 = vmatpush1.msra.mxu0 %v767
        %1061 = vmatprep.subr.mxu0 0.0
        %1062 = vmatpush1.msra.mxu0 %v768
        %1063 = vmatprep.subr.mxu0 0.0
        %1064 = vmatpush1.msra.mxu0 %v769
        %1065 = vmatprep.subr.mxu0 0.0
        %1066 = vmatpush1.msra.mxu0 %v770
        %1067 = vmatprep.subr.mxu0 0.0
        %1068 = vmatpush1.msra.mxu0 %v771
        %1069 = vmatprep.subr.mxu0 0.0
        %1070 = vmatpush1.msra.mxu0 %v772
        %1071 = vmatprep.subr.mxu0 0.0
        %1072 = vmatpush1.msra.mxu0 %v773
        %1073 = vmatprep.subr.mxu0 0.0
        %1074 = vmatpush1.msra.mxu0 %v774
        %1075 = vmatprep.subr.mxu0 0.0
        %1076 = vmatpush1.msra.mxu0 %v775
        %1077 = vmatprep.subr.mxu0 0.0
        %1078 = vmatpush1.msra.mxu0 %v776
        %1079 = vmatprep.subr.mxu0 0.0
        %1080 = vmatpush1.msra.mxu0 %v777
        %1081 = vmatprep.subr.mxu0 0.0
        %1082 = vmatpush1.msra.mxu0 %v778
        %1083 = vmatprep.subr.mxu0 0.0
        %1084 = vmatpush1.msra.mxu0 %v779
        %1085 = vmatprep.subr.mxu0 0.0
        %1086 = vmatpush1.msra.mxu0 %v780
        %1087 = vmatprep.subr.mxu0 0.0
        %1088 = vmatpush1.msra.mxu0 %v781
        %1089 = vmatprep.subr.mxu0 0.0
        %1090 = vmatpush1.msra.mxu0 %v782
        %1091 = vmatprep.subr.mxu0 0.0
        %1092 = vmatpush1.msra.mxu0 %v783
        %1093 = vmatprep.subr.mxu0 0.0
        %1094 = vmatpush1.msra.mxu0 %v784
        %1095 = vmatprep.subr.mxu0 0.0
        %1096 = vmatpush1.msra.mxu0 %v785
        %1097 = vmatprep.subr.mxu0 0.0
        %1098 = vmatpush1.msra.mxu0 %v786
        %1099 = vmatprep.subr.mxu0 0.0
        %1100 = vmatpush1.msra.mxu0 %v787
        %1101 = vmatprep.subr.mxu0 0.0
        %1102 = vmatpush1.msra.mxu0 0.0
        %1103 = vmatprep.subr.mxu0 0.0
        %1104 = vmatpush1.msra.mxu0 0.0
        %1105 = vmatprep.subr.mxu0 0.0
        %1106 = vmatpush1.msra.mxu0 0.0
        %1107 = vmatprep.subr.mxu0 0.0
        %1108 = vmatpush1.msra.mxu0 0.0
        %1109 = vmatprep.subr.mxu0 0.0
        %1110 = vmatpush1.msra.mxu0 0.0
        %1111 = vmatprep.subr.mxu0 0.0
        %1112 = vmatpush1.msra.mxu0 0.0
        %1113 = vmatprep.subr.mxu0 0.0
        %1114 = vmatpush1.msra.mxu0 0.0
        %1115 = vmatprep.subr.mxu0 0.0
        %1116 = vmatpush1.msra.mxu0 0.0
        %1117 = vmatprep.mubr.f32.mxu0 %v982
        %1118 = vmatmul.mubr.f32.gmra.mrb[0].mxu0 %v788
        %v1119 = vpop.f32.mrb[0].mxu0
        %v1120 = vadd.f32 %v863, %v1119
        %v1121 = vpop.f32.mrb[0].mxu0
        %1122 = vmatprep.mubr.f32.mxu0 %v985
        %1123 = vmatmul.mubr.f32.gmra.mrb[0].mxu0 %v790
        %v1124 = vpop.f32.mrb[0].mxu0
        %v1125 = vadd.f32 %v868, %v1124
        %v1126 = vpop.f32.mrb[0].mxu0
        %1127 = vmatprep.mubr.f32.mxu0 %v988
        %1128 = vmatmul.mubr.f32.gmra.mrb[0].mxu0 %v792
        %v1129 = vpop.f32.mrb[0].mxu0
        %v1130 = vadd.f32 %v873, %v1129
        %v1131 = vpop.f32.mrb[0].mxu0
        %1132 = vmatprep.mubr.f32.mxu0 %v991
        %1133 = vmatmul.mubr.f32.gmra.mrb[0].mxu0 %v794
        %v1134 = vpop.f32.mrb[0].mxu0
        %v1135 = vadd.f32 %v878, %v1134
        %v1136 = vpop.f32.mrb[0].mxu0
        %1137 = vmatprep.mubr.f32.mxu0 %v994
        %1138 = vmatmul.mubr.f32.gmra.mrb[0].mxu0 %v796
        %v1139 = vpop.f32.mrb[0].mxu0
        %v1140 = vadd.f32 %v883, %v1139
        %v1141 = vpop.f32.mrb[0].mxu0
        %1142 = vmatprep.mubr.f32.mxu0 %v997
        %1143 = vmatmul.mubr.f32.gmra.mrb[0].mxu0 %v798
        %v1144 = vpop.f32.mrb[0].mxu0
        %v1145 = vadd.f32 %v888, %v1144
        %v1146 = vpop.f32.mrb[0].mxu0
        %1147 = vmatprep.mubr.f32.mxu0 %v1000
        %1148 = vmatmul.mubr.f32.gmra.mrb[0].mxu0 %v800
        %v1149 = vpop.f32.mrb[0].mxu0
        %v1150 = vadd.f32 %v893, %v1149
        %v1151 = vpop.f32.mrb[0].mxu0
        %1152 = vmatprep.mubr.f32.mxu0 %v1003
        %1153 = vmatmul.mubr.f32.gmra.mrb[0].mxu0 %v802
        %v1154 = vpop.f32.mrb[0].mxu0
        %v1155 = vadd.f32 %v898, %v1154
        %v1156 = vpop.f32.mrb[0].mxu0
        %1157 = vmatprep.mubr.f32.mxu0 %v1006
        %1158 = vmatmul.mubr.f32.gmra.mrb[0].mxu0 %v804
        %v1159 = vpop.f32.mrb[0].mxu0
        %v1160 = vadd.f32 %v903, %v1159
        %v1161 = vpop.f32.mrb[0].mxu0
        %1162 = vmatprep.mubr.f32.mxu0 %v1009
        %1163 = vmatmul.mubr.f32.gmra.mrb[0].mxu0 %v806
        %v1164 = vpop.f32.mrb[0].mxu0
        %v1165 = vadd.f32 %v908, %v1164
        %v1166 = vpop.f32.mrb[0].mxu0
        %1167 = vmatprep.mubr.f32.mxu0 %v1012
        %1168 = vmatmul.mubr.f32.gmra.mrb[0].mxu0 %v808
        %v1169 = vpop.f32.mrb[0].mxu0
        %v1170 = vadd.f32 %v913, %v1169
        %v1171 = vpop.f32.mrb[0].mxu0
        %1172 = vmatprep.mubr.f32.mxu0 %v1015
        %1173 = vmatmul.mubr.f32.gmra.mrb[0].mxu0 %v810
        %v1174 = vpop.f32.mrb[0].mxu0
        %v1175 = vadd.f32 %v918, %v1174
        %v1176 = vpop.f32.mrb[0].mxu0
        %1177 = vmatprep.mubr.f32.mxu0 %v1018
        %1178 = vmatmul.mubr.f32.gmra.mrb[0].mxu0 %v812
        %v1179 = vpop.f32.mrb[0].mxu0
        %v1180 = vadd.f32 %v923, %v1179
        %v1181 = vpop.f32.mrb[0].mxu0
        %1182 = vmatprep.mubr.f32.mxu0 %v1021
        %1183 = vmatmul.mubr.f32.gmra.mrb[0].mxu0 %v814
        %v1184 = vpop.f32.mrb[0].mxu0
        %v1185 = vadd.f32 %v928, %v1184
        %v1186 = vpop.f32.mrb[0].mxu0
        %1187 = vmatprep.mubr.f32.mxu0 %v1024
        %1188 = vmatmul.mubr.f32.gmra.mrb[0].mxu0 %v816
        %v1189 = vpop.f32.mrb[0].mxu0
        %v1190 = vadd.f32 %v933, %v1189
        %v1191 = vpop.f32.mrb[0].mxu0
        %1192 = vmatprep.mubr.f32.mxu0 %v1027
        %1193 = vmatmul.mubr.f32.gmra.mrb[0].mxu0 %v818
        %v1194 = vpop.f32.mrb[0].mxu0
        %v1195 = vadd.f32 %v938, %v1194
        %v1196 = vpop.f32.mrb[0].mxu0
        %1197 = vmatprep.mubr.f32.mxu0 %v1030
        %1198 = vmatmul.mubr.f32.gmra.mrb[0].mxu0 %v820
        %v1199 = vpop.f32.mrb[0].mxu0
        %v1200 = vadd.f32 %v943, %v1199
        %v1201 = vpop.f32.mrb[0].mxu0
        %1202 = vmatprep.mubr.f32.mxu0 %v1033
        %1203 = vmatmul.mubr.f32.gmra.mrb[0].mxu0 %v822
        %v1204 = vpop.f32.mrb[0].mxu0
        %v1205 = vadd.f32 %v948, %v1204
        %v1206 = vpop.f32.mrb[0].mxu0
        %1207 = vmatprep.mubr.f32.mxu0 %v1036
        %1208 = vmatmul.mubr.f32.gmra.mrb[0].mxu0 %v824
        %v1209 = vpop.f32.mrb[0].mxu0
        %v1210 = vadd.f32 %v953, %v1209
        %v1211 = vpop.f32.mrb[0].mxu0
        %1212 = vmatprep.mubr.f32.mxu0 %v1039
        %1213 = vmatmul.mubr.f32.gmra.mrb[0].mxu0 %v826
        %v1214 = vpop.f32.mrb[0].mxu0
        %v1215 = vadd.f32 %v958, %v1214
        %v1216 = vpop.f32.mrb[0].mxu0
        %1217 = vmatprep.mubr.f32.mxu0 %v1042
        %1218 = vmatmul.mubr.f32.gmra.mrb[0].mxu0 %v828
        %v1219 = vpop.f32.mrb[0].mxu0
        %v1220 = vadd.f32 %v963, %v1219
        %v1221 = vpop.f32.mrb[0].mxu0
        %1222 = vmatprep.mubr.f32.mxu0 %v1045
        %1223 = vmatmul.mubr.f32.gmra.mrb[0].mxu0 %v830
        %v1224 = vpop.f32.mrb[0].mxu0
        %v1225 = vadd.f32 %v968, %v1224
        %v1226 = vpop.f32.mrb[0].mxu0
        %1227 = vmatprep.mubr.f32.mxu0 %v1048
        %1228 = vmatmul.mubr.f32.gmra.mrb[0].mxu0 %v832
        %v1229 = vpop.f32.mrb[0].mxu0
        %v1230 = vadd.f32 %v973, %v1229
        %v1231 = vpop.f32.mrb[0].mxu0
        %1232 = vmatprep.mubr.f32.mxu0 %v1051
        %1233 = vmatmul.mubr.f32.gmra.mrb[0].mxu0 %v834
        %v1234 = vpop.f32.mrb[0].mxu0
        %v1235 = vadd.f32 %v978, %v1234
        %v1236 = vpop.f32.mrb[0].mxu0
        %1237 = vdwg.mxu0
        %v1238 = vtanh.pop %v1120
        %v1239 = vtanh.pop %v1125
        %v1240 = vtanh.pop %v1130
        %v1241 = vtanh.pop %v1135
        %v1242 = vtanh.pop %v1140
        %v1243 = vtanh.pop %v1145
        %v1244 = vtanh.pop %v1150
        %v1245 = vtanh.pop %v1155
        %v1246 = vtanh.pop %v1160
        %v1247 = vtanh.pop %v1165
        %v1248 = vtanh.pop %v1170
        %v1249 = vtanh.pop %v1175
        %v1250 = vtanh.pop %v1180
        %v1251 = vtanh.pop %v1185
        %v1252 = vtanh.pop %v1190
        %v1253 = vtanh.pop %v1195
        %v1254 = vtanh.pop %v1200
        %v1255 = vtanh.pop %v1205
        %v1256 = vtanh.pop %v1210
        %v1257 = vtanh.pop %v1215
        %v1258 = vtanh.pop %v1220
        %v1259 = vtanh.pop %v1225
        %v1260 = vtanh.pop %v1230
        %v1261 = vtanh.pop %v1235
        %s1262 = scalar_lea.vmem [#allocation2], 384
        %v1263 = vld [vmem:[%s1262] sm:$0xff]
        %v1264 = vld [vmem:[%s1262 + $0x8] sm:$0xff]
        %v1265 = vld [vmem:[%s1262 + $0x10] sm:$0xff]
        %v1266 = vld [vmem:[%s1262 + $0x18] sm:$0xff]
        %v1267 = vld [vmem:[%s1262 + $0x20] sm:$0xff]
        %v1268 = vld [vmem:[%s1262 + $0x28] sm:$0xff]
        %v1269 = vld [vmem:[%s1262 + $0x30] sm:$0xff]
        %v1270 = vld [vmem:[%s1262 + $0x38] sm:$0xff]
        %v1271 = vld [vmem:[%s1262 + $0x40] sm:$0xff]
        %v1272 = vld [vmem:[%s1262 + $0x48] sm:$0xff]
        %v1273 = vld [vmem:[%s1262 + $0x50] sm:$0xff]
        %v1274 = vld [vmem:[%s1262 + $0x58] sm:$0xff]
        %v1275 = vld [vmem:[%s1262 + $0x60] sm:$0xff]
        %v1276 = vld [vmem:[%s1262 + $0x68] sm:$0xff]
        %v1277 = vld [vmem:[%s1262 + $0x70] sm:$0xff]
        %v1278 = vld [vmem:[%s1262 + $0x78] sm:$0xff]
        %v1279 = vld [vmem:[%s1262 + $0x80] sm:$0xff]
        %v1280 = vld [vmem:[%s1262 + $0x88] sm:$0xff]
        %v1281 = vld [vmem:[%s1262 + $0x90] sm:$0xff]
        %v1282 = vld [vmem:[%s1262 + $0x98] sm:$0xff]
        %v1283 = vld [vmem:[%s1262 + $0xa0] sm:$0xff]
        %v1284 = vld [vmem:[%s1262 + $0xa8] sm:$0xff]
        %v1285 = vld [vmem:[%s1262 + $0xb0] sm:$0xff]
        %v1286 = vld [vmem:[%s1262 + $0xb8] sm:$0xff]
        %v1287 = vld [vmem:[%s1262 + $0xc0] sm:$0xff]
        %v1288 = vld [vmem:[%s1262 + $0xc8] sm:$0xff]
        %v1289 = vld [vmem:[%s1262 + $0xd0] sm:$0xff]
        %v1290 = vld [vmem:[%s1262 + $0xd8] sm:$0xff]
        %v1291 = vld [vmem:[%s1262 + $0xe0] sm:$0xff]
        %v1292 = vld [vmem:[%s1262 + $0xe8] sm:$0xff]
        %v1293 = vld [vmem:[%s1262 + $0xf0] sm:$0xff]
        %v1294 = vld [vmem:[%s1262 + $0xf8] sm:$0xff]
        %v1295 = vld [vmem:[%s1262 + $0x100] sm:$0xff]
        %v1296 = vld [vmem:[%s1262 + $0x108] sm:$0xff]
        %v1297 = vld [vmem:[%s1262 + $0x110] sm:$0xff]
        %v1298 = vld [vmem:[%s1262 + $0x118] sm:$0xff]
        %v1299 = vld [vmem:[%s1262 + $0x120] sm:$0xff]
        %v1300 = vld [vmem:[%s1262 + $0x128] sm:$0xff]
        %v1301 = vld [vmem:[%s1262 + $0x130] sm:$0xff]
        %v1302 = vld [vmem:[%s1262 + $0x138] sm:$0xff]
        %v1303 = vld [vmem:[%s1262 + $0x140] sm:$0xff]
        %v1304 = vld [vmem:[%s1262 + $0x148] sm:$0xff]
        %v1305 = vld [vmem:[%s1262 + $0x150] sm:$0xff]
        %v1306 = vld [vmem:[%s1262 + $0x158] sm:$0xff]
        %v1307 = vld [vmem:[%s1262 + $0x160] sm:$0xff]
        %v1308 = vld [vmem:[%s1262 + $0x168] sm:$0xff]
        %v1309 = vld [vmem:[%s1262 + $0x170] sm:$0xff]
        %v1310 = vld [vmem:[%s1262 + $0x178] sm:$0xff]
        %s1311 = scalar_lea.vmem %s5, 192
        %v1312 = vld [vmem:[%s1311] sm:$0xff]
        %v1313 = vld [vmem:[%s1311 + $0x8] sm:$0xff]
        %v1314 = vld [vmem:[%s1311 + $0x10] sm:$0xff]
        %v1315 = vld [vmem:[%s1311 + $0x18] sm:$0xff]
        %v1316 = vld [vmem:[%s1311 + $0x20] sm:$0xff]
        %v1317 = vld [vmem:[%s1311 + $0x28] sm:$0xff]
        %v1318 = vld [vmem:[%s1311 + $0x30] sm:$0xff]
        %v1319 = vld [vmem:[%s1311 + $0x38] sm:$0xff]
        %v1320 = vld [vmem:[%s1311 + $0x40] sm:$0xff]
        %v1321 = vld [vmem:[%s1311 + $0x48] sm:$0xff]
        %v1322 = vld [vmem:[%s1311 + $0x50] sm:$0xff]
        %v1323 = vld [vmem:[%s1311 + $0x58] sm:$0xff]
        %v1324 = vld [vmem:[%s1311 + $0x60] sm:$0xff]
        %v1325 = vld [vmem:[%s1311 + $0x68] sm:$0xff]
        %v1326 = vld [vmem:[%s1311 + $0x70] sm:$0xff]
        %v1327 = vld [vmem:[%s1311 + $0x78] sm:$0xff]
        %v1328 = vld [vmem:[%s1311 + $0x80] sm:$0xff]
        %v1329 = vld [vmem:[%s1311 + $0x88] sm:$0xff]
        %v1330 = vld [vmem:[%s1311 + $0x90] sm:$0xff]
        %v1331 = vld [vmem:[%s1311 + $0x98] sm:$0xff]
        %v1332 = vld [vmem:[%s1311 + $0xa0] sm:$0xff]
        %v1333 = vld [vmem:[%s1311 + $0xa8] sm:$0xff]
        %v1334 = vld [vmem:[%s1311 + $0xb0] sm:$0xff]
        %v1335 = vld [vmem:[%s1311 + $0xb8] sm:$0xff]
        %1337 = vset.pattern.permute.xlu0 0
        %1338 = vperm.xlu0 %1337, %v1312
        %v1339 = vpop.permute.xlu0 %1338
        %1342 = vset.pattern.permute.xlu0 0
        %1343 = vperm.xlu0 %1342, %v1313
        %v1344 = vpop.permute.xlu0 %1343
        %1347 = vset.pattern.permute.xlu0 0
        %1348 = vperm.xlu0 %1347, %v1314
        %v1349 = vpop.permute.xlu0 %1348
        %1352 = vset.pattern.permute.xlu0 0
        %1353 = vperm.xlu0 %1352, %v1315
        %v1354 = vpop.permute.xlu0 %1353
        %1357 = vset.pattern.permute.xlu0 0
        %1358 = vperm.xlu0 %1357, %v1316
        %v1359 = vpop.permute.xlu0 %1358
        %1362 = vset.pattern.permute.xlu0 0
        %1363 = vperm.xlu0 %1362, %v1317
        %v1364 = vpop.permute.xlu0 %1363
        %1367 = vset.pattern.permute.xlu0 0
        %1368 = vperm.xlu0 %1367, %v1318
        %v1369 = vpop.permute.xlu0 %1368
        %1372 = vset.pattern.permute.xlu0 0
        %1373 = vperm.xlu0 %1372, %v1319
        %v1374 = vpop.permute.xlu0 %1373
        %1377 = vset.pattern.permute.xlu0 0
        %1378 = vperm.xlu0 %1377, %v1320
        %v1379 = vpop.permute.xlu0 %1378
        %1382 = vset.pattern.permute.xlu0 0
        %1383 = vperm.xlu0 %1382, %v1321
        %v1384 = vpop.permute.xlu0 %1383
        %1387 = vset.pattern.permute.xlu0 0
        %1388 = vperm.xlu0 %1387, %v1322
        %v1389 = vpop.permute.xlu0 %1388
        %1392 = vset.pattern.permute.xlu0 0
        %1393 = vperm.xlu0 %1392, %v1323
        %v1394 = vpop.permute.xlu0 %1393
        %1397 = vset.pattern.permute.xlu0 0
        %1398 = vperm.xlu0 %1397, %v1324
        %v1399 = vpop.permute.xlu0 %1398
        %1402 = vset.pattern.permute.xlu0 0
        %1403 = vperm.xlu0 %1402, %v1325
        %v1404 = vpop.permute.xlu0 %1403
        %1407 = vset.pattern.permute.xlu0 0
        %1408 = vperm.xlu0 %1407, %v1326
        %v1409 = vpop.permute.xlu0 %1408
        %1412 = vset.pattern.permute.xlu0 0
        %1413 = vperm.xlu0 %1412, %v1327
        %v1414 = vpop.permute.xlu0 %1413
        %1417 = vset.pattern.permute.xlu0 0
        %1418 = vperm.xlu0 %1417, %v1328
        %v1419 = vpop.permute.xlu0 %1418
        %1422 = vset.pattern.permute.xlu0 0
        %1423 = vperm.xlu0 %1422, %v1329
        %v1424 = vpop.permute.xlu0 %1423
        %1427 = vset.pattern.permute.xlu0 0
        %1428 = vperm.xlu0 %1427, %v1330
        %v1429 = vpop.permute.xlu0 %1428
        %1432 = vset.pattern.permute.xlu0 0
        %1433 = vperm.xlu0 %1432, %v1331
        %v1434 = vpop.permute.xlu0 %1433
        %1437 = vset.pattern.permute.xlu0 0
        %1438 = vperm.xlu0 %1437, %v1332
        %v1439 = vpop.permute.xlu0 %1438
        %1442 = vset.pattern.permute.xlu0 0
        %1443 = vperm.xlu0 %1442, %v1333
        %v1444 = vpop.permute.xlu0 %1443
        %1447 = vset.pattern.permute.xlu0 0
        %1448 = vperm.xlu0 %1447, %v1334
        %v1449 = vpop.permute.xlu0 %1448
        %1452 = vset.pattern.permute.xlu0 0
        %1453 = vperm.xlu0 %1452, %v1335
        %v1454 = vpop.permute.xlu0 %1453
        %v1457 = vsel %vm980, %v1264, 0
        %v1460 = vsel %vm980, %v1266, 0
        %v1463 = vsel %vm980, %v1268, 0
        %v1466 = vsel %vm980, %v1270, 0
        %v1469 = vsel %vm980, %v1272, 0
        %v1472 = vsel %vm980, %v1274, 0
        %v1475 = vsel %vm980, %v1276, 0
        %v1478 = vsel %vm980, %v1278, 0
        %v1481 = vsel %vm980, %v1280, 0
        %v1484 = vsel %vm980, %v1282, 0
        %v1487 = vsel %vm980, %v1284, 0
        %v1490 = vsel %vm980, %v1286, 0
        %v1493 = vsel %vm980, %v1288, 0
        %v1496 = vsel %vm980, %v1290, 0
        %v1499 = vsel %vm980, %v1292, 0
        %v1502 = vsel %vm980, %v1294, 0
        %v1505 = vsel %vm980, %v1296, 0
        %v1508 = vsel %vm980, %v1298, 0
        %v1511 = vsel %vm980, %v1300, 0
        %v1514 = vsel %vm980, %v1302, 0
        %v1517 = vsel %vm980, %v1304, 0
        %v1520 = vsel %vm980, %v1306, 0
        %v1523 = vsel %vm980, %v1308, 0
        %v1526 = vsel %vm980, %v1310, 0
        %1528 = vmatprep.subr.mxu0 0.0
        %1529 = vmatpush1.msra.mxu0 %v1238
        %1530 = vmatprep.subr.mxu0 0.0
        %1531 = vmatpush1.msra.mxu0 %v1239
        %1532 = vmatprep.subr.mxu0 0.0
        %1533 = vmatpush1.msra.mxu0 %v1240
        %1534 = vmatprep.subr.mxu0 0.0
        %1535 = vmatpush1.msra.mxu0 %v1241
        %1536 = vmatprep.subr.mxu0 0.0
        %1537 = vmatpush1.msra.mxu0 %v1242
        %1538 = vmatprep.subr.mxu0 0.0
        %1539 = vmatpush1.msra.mxu0 %v1243
        %1540 = vmatprep.subr.mxu0 0.0
        %1541 = vmatpush1.msra.mxu0 %v1244
        %1542 = vmatprep.subr.mxu0 0.0
        %1543 = vmatpush1.msra.mxu0 %v1245
        %1544 = vmatprep.subr.mxu0 0.0
        %1545 = vmatpush1.msra.mxu0 %v1246
        %1546 = vmatprep.subr.mxu0 0.0
        %1547 = vmatpush1.msra.mxu0 %v1247
        %1548 = vmatprep.subr.mxu0 0.0
        %1549 = vmatpush1.msra.mxu0 %v1248
        %1550 = vmatprep.subr.mxu0 0.0
        %1551 = vmatpush1.msra.mxu0 %v1249
        %1552 = vmatprep.subr.mxu0 0.0
        %1553 = vmatpush1.msra.mxu0 %v1250
        %1554 = vmatprep.subr.mxu0 0.0
        %1555 = vmatpush1.msra.mxu0 %v1251
        %1556 = vmatprep.subr.mxu0 0.0
        %1557 = vmatpush1.msra.mxu0 %v1252
        %1558 = vmatprep.subr.mxu0 0.0
        %1559 = vmatpush1.msra.mxu0 %v1253
        %1560 = vmatprep.subr.mxu0 0.0
        %1561 = vmatpush1.msra.mxu0 %v1254
        %1562 = vmatprep.subr.mxu0 0.0
        %1563 = vmatpush1.msra.mxu0 %v1255
        %1564 = vmatprep.subr.mxu0 0.0
        %1565 = vmatpush1.msra.mxu0 %v1256
        %1566 = vmatprep.subr.mxu0 0.0
        %1567 = vmatpush1.msra.mxu0 %v1257
        %1568 = vmatprep.subr.mxu0 0.0
        %1569 = vmatpush1.msra.mxu0 %v1258
        %1570 = vmatprep.subr.mxu0 0.0
        %1571 = vmatpush1.msra.mxu0 %v1259
        %1572 = vmatprep.subr.mxu0 0.0
        %1573 = vmatpush1.msra.mxu0 %v1260
        %1574 = vmatprep.subr.mxu0 0.0
        %1575 = vmatpush1.msra.mxu0 %v1261
        %1576 = vmatprep.subr.mxu0 0.0
        %1577 = vmatpush1.msra.mxu0 0.0
        %1578 = vmatprep.subr.mxu0 0.0
        %1579 = vmatpush1.msra.mxu0 0.0
        %1580 = vmatprep.subr.mxu0 0.0
        %1581 = vmatpush1.msra.mxu0 0.0
        %1582 = vmatprep.subr.mxu0 0.0
        %1583 = vmatpush1.msra.mxu0 0.0
        %1584 = vmatprep.subr.mxu0 0.0
        %1585 = vmatpush1.msra.mxu0 0.0
        %1586 = vmatprep.subr.mxu0 0.0
        %1587 = vmatpush1.msra.mxu0 0.0
        %1588 = vmatprep.subr.mxu0 0.0
        %1589 = vmatpush1.msra.mxu0 0.0
        %1590 = vmatprep.subr.mxu0 0.0
        %1591 = vmatpush1.msra.mxu0 0.0
        %1592 = vmatprep.mubr.f32.mxu0 %v1457
        %1593 = vmatmul.mubr.f32.gmra.mrb[0].mxu0 %v1263
        %v1594 = vpop.f32.mrb[0].mxu0
        %v1595 = vadd.f32 %v1339, %v1594
        %v1596 = vpop.f32.mrb[0].mxu0
        %1597 = vmatprep.mubr.f32.mxu0 %v1460
        %1598 = vmatmul.mubr.f32.gmra.mrb[0].mxu0 %v1265
        %v1599 = vpop.f32.mrb[0].mxu0
        %v1600 = vadd.f32 %v1344, %v1599
        %v1601 = vpop.f32.mrb[0].mxu0
        %1602 = vmatprep.mubr.f32.mxu0 %v1463
        %1603 = vmatmul.mubr.f32.gmra.mrb[0].mxu0 %v1267
        %v1604 = vpop.f32.mrb[0].mxu0
        %v1605 = vadd.f32 %v1349, %v1604
        %v1606 = vpop.f32.mrb[0].mxu0
        %1607 = vmatprep.mubr.f32.mxu0 %v1466
        %1608 = vmatmul.mubr.f32.gmra.mrb[0].mxu0 %v1269
        %v1609 = vpop.f32.mrb[0].mxu0
        %v1610 = vadd.f32 %v1354, %v1609
        %v1611 = vpop.f32.mrb[0].mxu0
        %1612 = vmatprep.mubr.f32.mxu0 %v1469
        %1613 = vmatmul.mubr.f32.gmra.mrb[0].mxu0 %v1271
        %v1614 = vpop.f32.mrb[0].mxu0
        %v1615 = vadd.f32 %v1359, %v1614
        %v1616 = vpop.f32.mrb[0].mxu0
        %1617 = vmatprep.mubr.f32.mxu0 %v1472
        %1618 = vmatmul.mubr.f32.gmra.mrb[0].mxu0 %v1273
        %v1619 = vpop.f32.mrb[0].mxu0
        %v1620 = vadd.f32 %v1364, %v1619
        %v1621 = vpop.f32.mrb[0].mxu0
        %1622 = vmatprep.mubr.f32.mxu0 %v1475
        %1623 = vmatmul.mubr.f32.gmra.mrb[0].mxu0 %v1275
        %v1624 = vpop.f32.mrb[0].mxu0
        %v1625 = vadd.f32 %v1369, %v1624
        %v1626 = vpop.f32.mrb[0].mxu0
        %1627 = vmatprep.mubr.f32.mxu0 %v1478
        %1628 = vmatmul.mubr.f32.gmra.mrb[0].mxu0 %v1277
        %v1629 = vpop.f32.mrb[0].mxu0
        %v1630 = vadd.f32 %v1374, %v1629
        %v1631 = vpop.f32.mrb[0].mxu0
        %1632 = vmatprep.mubr.f32.mxu0 %v1481
        %1633 = vmatmul.mubr.f32.gmra.mrb[0].mxu0 %v1279
        %v1634 = vpop.f32.mrb[0].mxu0
        %v1635 = vadd.f32 %v1379, %v1634
        %v1636 = vpop.f32.mrb[0].mxu0
        %1637 = vmatprep.mubr.f32.mxu0 %v1484
        %1638 = vmatmul.mubr.f32.gmra.mrb[0].mxu0 %v1281
        %v1639 = vpop.f32.mrb[0].mxu0
        %v1640 = vadd.f32 %v1384, %v1639
        %v1641 = vpop.f32.mrb[0].mxu0
        %1642 = vmatprep.mubr.f32.mxu0 %v1487
        %1643 = vmatmul.mubr.f32.gmra.mrb[0].mxu0 %v1283
        %v1644 = vpop.f32.mrb[0].mxu0
        %v1645 = vadd.f32 %v1389, %v1644
        %v1646 = vpop.f32.mrb[0].mxu0
        %1647 = vmatprep.mubr.f32.mxu0 %v1490
        %1648 = vmatmul.mubr.f32.gmra.mrb[0].mxu0 %v1285
        %v1649 = vpop.f32.mrb[0].mxu0
        %v1650 = vadd.f32 %v1394, %v1649
        %v1651 = vpop.f32.mrb[0].mxu0
        %1652 = vmatprep.mubr.f32.mxu0 %v1493
        %1653 = vmatmul.mubr.f32.gmra.mrb[0].mxu0 %v1287
        %v1654 = vpop.f32.mrb[0].mxu0
        %v1655 = vadd.f32 %v1399, %v1654
        %v1656 = vpop.f32.mrb[0].mxu0
        %1657 = vmatprep.mubr.f32.mxu0 %v1496
        %1658 = vmatmul.mubr.f32.gmra.mrb[0].mxu0 %v1289
        %v1659 = vpop.f32.mrb[0].mxu0
        %v1660 = vadd.f32 %v1404, %v1659
        %v1661 = vpop.f32.mrb[0].mxu0
        %1662 = vmatprep.mubr.f32.mxu0 %v1499
        %1663 = vmatmul.mubr.f32.gmra.mrb[0].mxu0 %v1291
        %v1664 = vpop.f32.mrb[0].mxu0
        %v1665 = vadd.f32 %v1409, %v1664
        %v1666 = vpop.f32.mrb[0].mxu0
        %1667 = vmatprep.mubr.f32.mxu0 %v1502
        %1668 = vmatmul.mubr.f32.gmra.mrb[0].mxu0 %v1293
        %v1669 = vpop.f32.mrb[0].mxu0
        %v1670 = vadd.f32 %v1414, %v1669
        %v1671 = vpop.f32.mrb[0].mxu0
        %1672 = vmatprep.mubr.f32.mxu0 %v1505
        %1673 = vmatmul.mubr.f32.gmra.mrb[0].mxu0 %v1295
        %v1674 = vpop.f32.mrb[0].mxu0
        %v1675 = vadd.f32 %v1419, %v1674
        %v1676 = vpop.f32.mrb[0].mxu0
        %1677 = vmatprep.mubr.f32.mxu0 %v1508
        %1678 = vmatmul.mubr.f32.gmra.mrb[0].mxu0 %v1297
        %v1679 = vpop.f32.mrb[0].mxu0
        %v1680 = vadd.f32 %v1424, %v1679
        %v1681 = vpop.f32.mrb[0].mxu0
        %1682 = vmatprep.mubr.f32.mxu0 %v1511
        %1683 = vmatmul.mubr.f32.gmra.mrb[0].mxu0 %v1299
        %v1684 = vpop.f32.mrb[0].mxu0
        %v1685 = vadd.f32 %v1429, %v1684
        %v1686 = vpop.f32.mrb[0].mxu0
        %1687 = vmatprep.mubr.f32.mxu0 %v1514
        %1688 = vmatmul.mubr.f32.gmra.mrb[0].mxu0 %v1301
        %v1689 = vpop.f32.mrb[0].mxu0
        %v1690 = vadd.f32 %v1434, %v1689
        %v1691 = vpop.f32.mrb[0].mxu0
        %1692 = vmatprep.mubr.f32.mxu0 %v1517
        %1693 = vmatmul.mubr.f32.gmra.mrb[0].mxu0 %v1303
        %v1694 = vpop.f32.mrb[0].mxu0
        %v1695 = vadd.f32 %v1439, %v1694
        %v1696 = vpop.f32.mrb[0].mxu0
        %1697 = vmatprep.mubr.f32.mxu0 %v1520
        %1698 = vmatmul.mubr.f32.gmra.mrb[0].mxu0 %v1305
        %v1699 = vpop.f32.mrb[0].mxu0
        %v1700 = vadd.f32 %v1444, %v1699
        %v1701 = vpop.f32.mrb[0].mxu0
        %1702 = vmatprep.mubr.f32.mxu0 %v1523
        %1703 = vmatmul.mubr.f32.gmra.mrb[0].mxu0 %v1307
        %v1704 = vpop.f32.mrb[0].mxu0
        %v1705 = vadd.f32 %v1449, %v1704
        %v1706 = vpop.f32.mrb[0].mxu0
        %1707 = vmatprep.mubr.f32.mxu0 %v1526
        %1708 = vmatmul.mubr.f32.gmra.mrb[0].mxu0 %v1309
        %v1709 = vpop.f32.mrb[0].mxu0
        %v1710 = vadd.f32 %v1454, %v1709
        %v1711 = vpop.f32.mrb[0].mxu0
        %1712 = vdwg.mxu0
        %v1713 = vtanh.pop %v1595
        %v1714 = vtanh.pop %v1600
        %v1715 = vtanh.pop %v1605
        %v1716 = vtanh.pop %v1610
        %v1717 = vtanh.pop %v1615
        %v1718 = vtanh.pop %v1620
        %v1719 = vtanh.pop %v1625
        %v1720 = vtanh.pop %v1630
        %v1721 = vtanh.pop %v1635
        %v1722 = vtanh.pop %v1640
        %v1723 = vtanh.pop %v1645
        %v1724 = vtanh.pop %v1650
        %v1725 = vtanh.pop %v1655
        %v1726 = vtanh.pop %v1660
        %v1727 = vtanh.pop %v1665
        %v1728 = vtanh.pop %v1670
        %v1729 = vtanh.pop %v1675
        %v1730 = vtanh.pop %v1680
        %v1731 = vtanh.pop %v1685
        %v1732 = vtanh.pop %v1690
        %v1733 = vtanh.pop %v1695
        %v1734 = vtanh.pop %v1700
        %v1735 = vtanh.pop %v1705
        %v1736 = vtanh.pop %v1710
        %s1737 = scalar_lea.vmem [#allocation2], 768
        %v1738 = vld [vmem:[%s1737] sm:$0xff]
        %v1739 = vld [vmem:[%s1737 + $0x8] sm:$0xff]
        %v1740 = vld [vmem:[%s1737 + $0x10] sm:$0xff]
        %v1741 = vld [vmem:[%s1737 + $0x18] sm:$0xff]
        %v1742 = vld [vmem:[%s1737 + $0x20] sm:$0xff]
        %v1743 = vld [vmem:[%s1737 + $0x28] sm:$0xff]
        %v1744 = vld [vmem:[%s1737 + $0x30] sm:$0xff]
        %v1745 = vld [vmem:[%s1737 + $0x38] sm:$0xff]
        %v1746 = vld [vmem:[%s1737 + $0x40] sm:$0xff]
        %v1747 = vld [vmem:[%s1737 + $0x48] sm:$0xff]
        %v1748 = vld [vmem:[%s1737 + $0x50] sm:$0xff]
        %v1749 = vld [vmem:[%s1737 + $0x58] sm:$0xff]
        %v1750 = vld [vmem:[%s1737 + $0x60] sm:$0xff]
        %v1751 = vld [vmem:[%s1737 + $0x68] sm:$0xff]
        %v1752 = vld [vmem:[%s1737 + $0x70] sm:$0xff]
        %v1753 = vld [vmem:[%s1737 + $0x78] sm:$0xff]
        %v1754 = vld [vmem:[%s1737 + $0x80] sm:$0xff]
        %v1755 = vld [vmem:[%s1737 + $0x88] sm:$0xff]
        %v1756 = vld [vmem:[%s1737 + $0x90] sm:$0xff]
        %v1757 = vld [vmem:[%s1737 + $0x98] sm:$0xff]
        %v1758 = vld [vmem:[%s1737 + $0xa0] sm:$0xff]
        %v1759 = vld [vmem:[%s1737 + $0xa8] sm:$0xff]
        %v1760 = vld [vmem:[%s1737 + $0xb0] sm:$0xff]
        %v1761 = vld [vmem:[%s1737 + $0xb8] sm:$0xff]
        %v1762 = vld [vmem:[%s1737 + $0xc0] sm:$0xff]
        %v1763 = vld [vmem:[%s1737 + $0xc8] sm:$0xff]
        %v1764 = vld [vmem:[%s1737 + $0xd0] sm:$0xff]
        %v1765 = vld [vmem:[%s1737 + $0xd8] sm:$0xff]
        %v1766 = vld [vmem:[%s1737 + $0xe0] sm:$0xff]
        %v1767 = vld [vmem:[%s1737 + $0xe8] sm:$0xff]
        %v1768 = vld [vmem:[%s1737 + $0xf0] sm:$0xff]
        %v1769 = vld [vmem:[%s1737 + $0xf8] sm:$0xff]
        %v1770 = vld [vmem:[%s1737 + $0x100] sm:$0xff]
        %v1771 = vld [vmem:[%s1737 + $0x108] sm:$0xff]
        %v1772 = vld [vmem:[%s1737 + $0x110] sm:$0xff]
        %v1773 = vld [vmem:[%s1737 + $0x118] sm:$0xff]
        %v1774 = vld [vmem:[%s1737 + $0x120] sm:$0xff]
        %v1775 = vld [vmem:[%s1737 + $0x128] sm:$0xff]
        %v1776 = vld [vmem:[%s1737 + $0x130] sm:$0xff]
        %v1777 = vld [vmem:[%s1737 + $0x138] sm:$0xff]
        %v1778 = vld [vmem:[%s1737 + $0x140] sm:$0xff]
        %v1779 = vld [vmem:[%s1737 + $0x148] sm:$0xff]
        %v1780 = vld [vmem:[%s1737 + $0x150] sm:$0xff]
        %v1781 = vld [vmem:[%s1737 + $0x158] sm:$0xff]
        %v1782 = vld [vmem:[%s1737 + $0x160] sm:$0xff]
        %v1783 = vld [vmem:[%s1737 + $0x168] sm:$0xff]
        %v1784 = vld [vmem:[%s1737 + $0x170] sm:$0xff]
        %v1785 = vld [vmem:[%s1737 + $0x178] sm:$0xff]
        %s1786 = scalar_lea.vmem %s5, 384
        %v1787 = vld [vmem:[%s1786] sm:$0xff]
        %v1788 = vld [vmem:[%s1786 + $0x8] sm:$0xff]
        %v1789 = vld [vmem:[%s1786 + $0x10] sm:$0xff]
        %v1790 = vld [vmem:[%s1786 + $0x18] sm:$0xff]
        %v1791 = vld [vmem:[%s1786 + $0x20] sm:$0xff]
        %v1792 = vld [vmem:[%s1786 + $0x28] sm:$0xff]
        %v1793 = vld [vmem:[%s1786 + $0x30] sm:$0xff]
        %v1794 = vld [vmem:[%s1786 + $0x38] sm:$0xff]
        %v1795 = vld [vmem:[%s1786 + $0x40] sm:$0xff]
        %v1796 = vld [vmem:[%s1786 + $0x48] sm:$0xff]
        %v1797 = vld [vmem:[%s1786 + $0x50] sm:$0xff]
        %v1798 = vld [vmem:[%s1786 + $0x58] sm:$0xff]
        %v1799 = vld [vmem:[%s1786 + $0x60] sm:$0xff]
        %v1800 = vld [vmem:[%s1786 + $0x68] sm:$0xff]
        %v1801 = vld [vmem:[%s1786 + $0x70] sm:$0xff]
        %v1802 = vld [vmem:[%s1786 + $0x78] sm:$0xff]
        %v1803 = vld [vmem:[%s1786 + $0x80] sm:$0xff]
        %v1804 = vld [vmem:[%s1786 + $0x88] sm:$0xff]
        %v1805 = vld [vmem:[%s1786 + $0x90] sm:$0xff]
        %v1806 = vld [vmem:[%s1786 + $0x98] sm:$0xff]
        %v1807 = vld [vmem:[%s1786 + $0xa0] sm:$0xff]
        %v1808 = vld [vmem:[%s1786 + $0xa8] sm:$0xff]
        %v1809 = vld [vmem:[%s1786 + $0xb0] sm:$0xff]
        %v1810 = vld [vmem:[%s1786 + $0xb8] sm:$0xff]
        %1812 = vset.pattern.permute.xlu0 0
        %1813 = vperm.xlu0 %1812, %v1787
        %v1814 = vpop.permute.xlu0 %1813
        %1817 = vset.pattern.permute.xlu0 0
        %1818 = vperm.xlu0 %1817, %v1788
        %v1819 = vpop.permute.xlu0 %1818
        %1822 = vset.pattern.permute.xlu0 0
        %1823 = vperm.xlu0 %1822, %v1789
        %v1824 = vpop.permute.xlu0 %1823
        %1827 = vset.pattern.permute.xlu0 0
        %1828 = vperm.xlu0 %1827, %v1790
        %v1829 = vpop.permute.xlu0 %1828
        %1832 = vset.pattern.permute.xlu0 0
        %1833 = vperm.xlu0 %1832, %v1791
        %v1834 = vpop.permute.xlu0 %1833
        %1837 = vset.pattern.permute.xlu0 0
        %1838 = vperm.xlu0 %1837, %v1792
        %v1839 = vpop.permute.xlu0 %1838
        %1842 = vset.pattern.permute.xlu0 0
        %1843 = vperm.xlu0 %1842, %v1793
        %v1844 = vpop.permute.xlu0 %1843
        %1847 = vset.pattern.permute.xlu0 0
        %1848 = vperm.xlu0 %1847, %v1794
        %v1849 = vpop.permute.xlu0 %1848
        %1852 = vset.pattern.permute.xlu0 0
        %1853 = vperm.xlu0 %1852, %v1795
        %v1854 = vpop.permute.xlu0 %1853
        %1857 = vset.pattern.permute.xlu0 0
        %1858 = vperm.xlu0 %1857, %v1796
        %v1859 = vpop.permute.xlu0 %1858
        %1862 = vset.pattern.permute.xlu0 0
        %1863 = vperm.xlu0 %1862, %v1797
        %v1864 = vpop.permute.xlu0 %1863
        %1867 = vset.pattern.permute.xlu0 0
        %1868 = vperm.xlu0 %1867, %v1798
        %v1869 = vpop.permute.xlu0 %1868
        %1872 = vset.pattern.permute.xlu0 0
        %1873 = vperm.xlu0 %1872, %v1799
        %v1874 = vpop.permute.xlu0 %1873
        %1877 = vset.pattern.permute.xlu0 0
        %1878 = vperm.xlu0 %1877, %v1800
        %v1879 = vpop.permute.xlu0 %1878
        %1882 = vset.pattern.permute.xlu0 0
        %1883 = vperm.xlu0 %1882, %v1801
        %v1884 = vpop.permute.xlu0 %1883
        %1887 = vset.pattern.permute.xlu0 0
        %1888 = vperm.xlu0 %1887, %v1802
        %v1889 = vpop.permute.xlu0 %1888
        %1892 = vset.pattern.permute.xlu0 0
        %1893 = vperm.xlu0 %1892, %v1803
        %v1894 = vpop.permute.xlu0 %1893
        %1897 = vset.pattern.permute.xlu0 0
        %1898 = vperm.xlu0 %1897, %v1804
        %v1899 = vpop.permute.xlu0 %1898
        %1902 = vset.pattern.permute.xlu0 0
        %1903 = vperm.xlu0 %1902, %v1805
        %v1904 = vpop.permute.xlu0 %1903
        %1907 = vset.pattern.permute.xlu0 0
        %1908 = vperm.xlu0 %1907, %v1806
        %v1909 = vpop.permute.xlu0 %1908
        %1912 = vset.pattern.permute.xlu0 0
        %1913 = vperm.xlu0 %1912, %v1807
        %v1914 = vpop.permute.xlu0 %1913
        %1917 = vset.pattern.permute.xlu0 0
        %1918 = vperm.xlu0 %1917, %v1808
        %v1919 = vpop.permute.xlu0 %1918
        %1922 = vset.pattern.permute.xlu0 0
        %1923 = vperm.xlu0 %1922, %v1809
        %v1924 = vpop.permute.xlu0 %1923
        %1927 = vset.pattern.permute.xlu0 0
        %1928 = vperm.xlu0 %1927, %v1810
        %v1929 = vpop.permute.xlu0 %1928
        %v1932 = vsel %vm980, %v1739, 0
        %v1935 = vsel %vm980, %v1741, 0
        %v1938 = vsel %vm980, %v1743, 0
        %v1941 = vsel %vm980, %v1745, 0
        %v1944 = vsel %vm980, %v1747, 0
        %v1947 = vsel %vm980, %v1749, 0
        %v1950 = vsel %vm980, %v1751, 0
        %v1953 = vsel %vm980, %v1753, 0
        %v1956 = vsel %vm980, %v1755, 0
        %v1959 = vsel %vm980, %v1757, 0
        %v1962 = vsel %vm980, %v1759, 0
        %v1965 = vsel %vm980, %v1761, 0
        %v1968 = vsel %vm980, %v1763, 0
        %v1971 = vsel %vm980, %v1765, 0
        %v1974 = vsel %vm980, %v1767, 0
        %v1977 = vsel %vm980, %v1769, 0
        %v1980 = vsel %vm980, %v1771, 0
        %v1983 = vsel %vm980, %v1773, 0
        %v1986 = vsel %vm980, %v1775, 0
        %v1989 = vsel %vm980, %v1777, 0
        %v1992 = vsel %vm980, %v1779, 0
        %v1995 = vsel %vm980, %v1781, 0
        %v1998 = vsel %vm980, %v1783, 0
        %v2001 = vsel %vm980, %v1785, 0
        %2003 = vmatprep.subr.mxu0 0.0
        %2004 = vmatpush1.msra.mxu0 %v1713
        %2005 = vmatprep.subr.mxu0 0.0
        %2006 = vmatpush1.msra.mxu0 %v1714
        %2007 = vmatprep.subr.mxu0 0.0
        %2008 = vmatpush1.msra.mxu0 %v1715
        %2009 = vmatprep.subr.mxu0 0.0
        %2010 = vmatpush1.msra.mxu0 %v1716
        %2011 = vmatprep.subr.mxu0 0.0
        %2012 = vmatpush1.msra.mxu0 %v1717
        %2013 = vmatprep.subr.mxu0 0.0
        %2014 = vmatpush1.msra.mxu0 %v1718
        %2015 = vmatprep.subr.mxu0 0.0
        %2016 = vmatpush1.msra.mxu0 %v1719
        %2017 = vmatprep.subr.mxu0 0.0
        %2018 = vmatpush1.msra.mxu0 %v1720
        %2019 = vmatprep.subr.mxu0 0.0
        %2020 = vmatpush1.msra.mxu0 %v1721
        %2021 = vmatprep.subr.mxu0 0.0
        %2022 = vmatpush1.msra.mxu0 %v1722
        %2023 = vmatprep.subr.mxu0 0.0
        %2024 = vmatpush1.msra.mxu0 %v1723
        %2025 = vmatprep.subr.mxu0 0.0
        %2026 = vmatpush1.msra.mxu0 %v1724
        %2027 = vmatprep.subr.mxu0 0.0
        %2028 = vmatpush1.msra.mxu0 %v1725
        %2029 = vmatprep.subr.mxu0 0.0
        %2030 = vmatpush1.msra.mxu0 %v1726
        %2031 = vmatprep.subr.mxu0 0.0
        %2032 = vmatpush1.msra.mxu0 %v1727
        %2033 = vmatprep.subr.mxu0 0.0
        %2034 = vmatpush1.msra.mxu0 %v1728
        %2035 = vmatprep.subr.mxu0 0.0
        %2036 = vmatpush1.msra.mxu0 %v1729
        %2037 = vmatprep.subr.mxu0 0.0
        %2038 = vmatpush1.msra.mxu0 %v1730
        %2039 = vmatprep.subr.mxu0 0.0
        %2040 = vmatpush1.msra.mxu0 %v1731
        %2041 = vmatprep.subr.mxu0 0.0
        %2042 = vmatpush1.msra.mxu0 %v1732
        %2043 = vmatprep.subr.mxu0 0.0
        %2044 = vmatpush1.msra.mxu0 %v1733
        %2045 = vmatprep.subr.mxu0 0.0
        %2046 = vmatpush1.msra.mxu0 %v1734
        %2047 = vmatprep.subr.mxu0 0.0
        %2048 = vmatpush1.msra.mxu0 %v1735
        %2049 = vmatprep.subr.mxu0 0.0
        %2050 = vmatpush1.msra.mxu0 %v1736
        %2051 = vmatprep.subr.mxu0 0.0
        %2052 = vmatpush1.msra.mxu0 0.0
        %2053 = vmatprep.subr.mxu0 0.0
        %2054 = vmatpush1.msra.mxu0 0.0
        %2055 = vmatprep.subr.mxu0 0.0
        %2056 = vmatpush1.msra.mxu0 0.0
        %2057 = vmatprep.subr.mxu0 0.0
        %2058 = vmatpush1.msra.mxu0 0.0
        %2059 = vmatprep.subr.mxu0 0.0
        %2060 = vmatpush1.msra.mxu0 0.0
        %2061 = vmatprep.subr.mxu0 0.0
        %2062 = vmatpush1.msra.mxu0 0.0
        %2063 = vmatprep.subr.mxu0 0.0
        %2064 = vmatpush1.msra.mxu0 0.0
        %2065 = vmatprep.subr.mxu0 0.0
        %2066 = vmatpush1.msra.mxu0 0.0
        %2067 = vmatprep.mubr.f32.mxu0 %v1932
        %2068 = vmatmul.mubr.f32.gmra.mrb[0].mxu0 %v1738
        %v2069 = vpop.f32.mrb[0].mxu0
        %v2070 = vadd.f32 %v1814, %v2069
        %v2071 = vpop.f32.mrb[0].mxu0
        %2072 = vmatprep.mubr.f32.mxu0 %v1935
        %2073 = vmatmul.mubr.f32.gmra.mrb[0].mxu0 %v1740
        %v2074 = vpop.f32.mrb[0].mxu0
        %v2075 = vadd.f32 %v1819, %v2074
        %v2076 = vpop.f32.mrb[0].mxu0
        %2077 = vmatprep.mubr.f32.mxu0 %v1938
        %2078 = vmatmul.mubr.f32.gmra.mrb[0].mxu0 %v1742
        %v2079 = vpop.f32.mrb[0].mxu0
        %v2080 = vadd.f32 %v1824, %v2079
        %v2081 = vpop.f32.mrb[0].mxu0
        %2082 = vmatprep.mubr.f32.mxu0 %v1941
        %2083 = vmatmul.mubr.f32.gmra.mrb[0].mxu0 %v1744
        %v2084 = vpop.f32.mrb[0].mxu0
        %v2085 = vadd.f32 %v1829, %v2084
        %v2086 = vpop.f32.mrb[0].mxu0
        %2087 = vmatprep.mubr.f32.mxu0 %v1944
        %2088 = vmatmul.mubr.f32.gmra.mrb[0].mxu0 %v1746
        %v2089 = vpop.f32.mrb[0].mxu0
        %v2090 = vadd.f32 %v1834, %v2089
        %v2091 = vpop.f32.mrb[0].mxu0
        %2092 = vmatprep.mubr.f32.mxu0 %v1947
        %2093 = vmatmul.mubr.f32.gmra.mrb[0].mxu0 %v1748
        %v2094 = vpop.f32.mrb[0].mxu0
        %v2095 = vadd.f32 %v1839, %v2094
        %v2096 = vpop.f32.mrb[0].mxu0
        %2097 = vmatprep.mubr.f32.mxu0 %v1950
        %2098 = vmatmul.mubr.f32.gmra.mrb[0].mxu0 %v1750
        %v2099 = vpop.f32.mrb[0].mxu0
        %v2100 = vadd.f32 %v1844, %v2099
        %v2101 = vpop.f32.mrb[0].mxu0
        %2102 = vmatprep.mubr.f32.mxu0 %v1953
        %2103 = vmatmul.mubr.f32.gmra.mrb[0].mxu0 %v1752
        %v2104 = vpop.f32.mrb[0].mxu0
        %v2105 = vadd.f32 %v1849, %v2104
        %v2106 = vpop.f32.mrb[0].mxu0
        %2107 = vmatprep.mubr.f32.mxu0 %v1956
        %2108 = vmatmul.mubr.f32.gmra.mrb[0].mxu0 %v1754
        %v2109 = vpop.f32.mrb[0].mxu0
        %v2110 = vadd.f32 %v1854, %v2109
        %v2111 = vpop.f32.mrb[0].mxu0
        %2112 = vmatprep.mubr.f32.mxu0 %v1959
        %2113 = vmatmul.mubr.f32.gmra.mrb[0].mxu0 %v1756
        %v2114 = vpop.f32.mrb[0].mxu0
        %v2115 = vadd.f32 %v1859, %v2114
        %v2116 = vpop.f32.mrb[0].mxu0
        %2117 = vmatprep.mubr.f32.mxu0 %v1962
        %2118 = vmatmul.mubr.f32.gmra.mrb[0].mxu0 %v1758
        %v2119 = vpop.f32.mrb[0].mxu0
        %v2120 = vadd.f32 %v1864, %v2119
        %v2121 = vpop.f32.mrb[0].mxu0
        %2122 = vmatprep.mubr.f32.mxu0 %v1965
        %2123 = vmatmul.mubr.f32.gmra.mrb[0].mxu0 %v1760
        %v2124 = vpop.f32.mrb[0].mxu0
        %v2125 = vadd.f32 %v1869, %v2124
        %v2126 = vpop.f32.mrb[0].mxu0
        %2127 = vmatprep.mubr.f32.mxu0 %v1968
        %2128 = vmatmul.mubr.f32.gmra.mrb[0].mxu0 %v1762
        %v2129 = vpop.f32.mrb[0].mxu0
        %v2130 = vadd.f32 %v1874, %v2129
        %v2131 = vpop.f32.mrb[0].mxu0
        %2132 = vmatprep.mubr.f32.mxu0 %v1971
        %2133 = vmatmul.mubr.f32.gmra.mrb[0].mxu0 %v1764
        %v2134 = vpop.f32.mrb[0].mxu0
        %v2135 = vadd.f32 %v1879, %v2134
        %v2136 = vpop.f32.mrb[0].mxu0
        %2137 = vmatprep.mubr.f32.mxu0 %v1974
        %2138 = vmatmul.mubr.f32.gmra.mrb[0].mxu0 %v1766
        %v2139 = vpop.f32.mrb[0].mxu0
        %v2140 = vadd.f32 %v1884, %v2139
        %v2141 = vpop.f32.mrb[0].mxu0
        %2142 = vmatprep.mubr.f32.mxu0 %v1977
        %2143 = vmatmul.mubr.f32.gmra.mrb[0].mxu0 %v1768
        %v2144 = vpop.f32.mrb[0].mxu0
        %v2145 = vadd.f32 %v1889, %v2144
        %v2146 = vpop.f32.mrb[0].mxu0
        %2147 = vmatprep.mubr.f32.mxu0 %v1980
        %2148 = vmatmul.mubr.f32.gmra.mrb[0].mxu0 %v1770
        %v2149 = vpop.f32.mrb[0].mxu0
        %v2150 = vadd.f32 %v1894, %v2149
        %v2151 = vpop.f32.mrb[0].mxu0
        %2152 = vmatprep.mubr.f32.mxu0 %v1983
        %2153 = vmatmul.mubr.f32.gmra.mrb[0].mxu0 %v1772
        %v2154 = vpop.f32.mrb[0].mxu0
        %v2155 = vadd.f32 %v1899, %v2154
        %v2156 = vpop.f32.mrb[0].mxu0
        %2157 = vmatprep.mubr.f32.mxu0 %v1986
        %2158 = vmatmul.mubr.f32.gmra.mrb[0].mxu0 %v1774
        %v2159 = vpop.f32.mrb[0].mxu0
        %v2160 = vadd.f32 %v1904, %v2159
        %v2161 = vpop.f32.mrb[0].mxu0
        %2162 = vmatprep.mubr.f32.mxu0 %v1989
        %2163 = vmatmul.mubr.f32.gmra.mrb[0].mxu0 %v1776
        %v2164 = vpop.f32.mrb[0].mxu0
        %v2165 = vadd.f32 %v1909, %v2164
        %v2166 = vpop.f32.mrb[0].mxu0
        %2167 = vmatprep.mubr.f32.mxu0 %v1992
        %2168 = vmatmul.mubr.f32.gmra.mrb[0].mxu0 %v1778
        %v2169 = vpop.f32.mrb[0].mxu0
        %v2170 = vadd.f32 %v1914, %v2169
        %v2171 = vpop.f32.mrb[0].mxu0
        %2172 = vmatprep.mubr.f32.mxu0 %v1995
        %2173 = vmatmul.mubr.f32.gmra.mrb[0].mxu0 %v1780
        %v2174 = vpop.f32.mrb[0].mxu0
        %v2175 = vadd.f32 %v1919, %v2174
        %v2176 = vpop.f32.mrb[0].mxu0
        %2177 = vmatprep.mubr.f32.mxu0 %v1998
        %2178 = vmatmul.mubr.f32.gmra.mrb[0].mxu0 %v1782
        %v2179 = vpop.f32.mrb[0].mxu0
        %v2180 = vadd.f32 %v1924, %v2179
        %v2181 = vpop.f32.mrb[0].mxu0
        %2182 = vmatprep.mubr.f32.mxu0 %v2001
        %2183 = vmatmul.mubr.f32.gmra.mrb[0].mxu0 %v1784
        %v2184 = vpop.f32.mrb[0].mxu0
        %v2185 = vadd.f32 %v1929, %v2184
        %v2186 = vpop.f32.mrb[0].mxu0
        %2187 = vdwg.mxu0
        %v2188 = vtanh.pop %v2070
        %v2189 = vtanh.pop %v2075
        %v2190 = vtanh.pop %v2080
        %v2191 = vtanh.pop %v2085
        %v2192 = vtanh.pop %v2090
        %v2193 = vtanh.pop %v2095
        %v2194 = vtanh.pop %v2100
        %v2195 = vtanh.pop %v2105
        %v2196 = vtanh.pop %v2110
        %v2197 = vtanh.pop %v2115
        %v2198 = vtanh.pop %v2120
        %v2199 = vtanh.pop %v2125
        %v2200 = vtanh.pop %v2130
        %v2201 = vtanh.pop %v2135
        %v2202 = vtanh.pop %v2140
        %v2203 = vtanh.pop %v2145
        %v2204 = vtanh.pop %v2150
        %v2205 = vtanh.pop %v2155
        %v2206 = vtanh.pop %v2160
        %v2207 = vtanh.pop %v2165
        %v2208 = vtanh.pop %v2170
        %v2209 = vtanh.pop %v2175
        %v2210 = vtanh.pop %v2180
        %v2211 = vtanh.pop %v2185
        %s2212 = scalar_lea.vmem [#allocation2], 1152
        %v2213 = vld [vmem:[%s2212] sm:$0xff]
        %v2214 = vld [vmem:[%s2212 + $0x8] sm:$0xff]
        %v2215 = vld [vmem:[%s2212 + $0x10] sm:$0xff]
        %v2216 = vld [vmem:[%s2212 + $0x18] sm:$0xff]
        %v2217 = vld [vmem:[%s2212 + $0x20] sm:$0xff]
        %v2218 = vld [vmem:[%s2212 + $0x28] sm:$0xff]
        %v2219 = vld [vmem:[%s2212 + $0x30] sm:$0xff]
        %v2220 = vld [vmem:[%s2212 + $0x38] sm:$0xff]
        %v2221 = vld [vmem:[%s2212 + $0x40] sm:$0xff]
        %v2222 = vld [vmem:[%s2212 + $0x48] sm:$0xff]
        %v2223 = vld [vmem:[%s2212 + $0x50] sm:$0xff]
        %v2224 = vld [vmem:[%s2212 + $0x58] sm:$0xff]
        %v2225 = vld [vmem:[%s2212 + $0x60] sm:$0xff]
        %v2226 = vld [vmem:[%s2212 + $0x68] sm:$0xff]
        %v2227 = vld [vmem:[%s2212 + $0x70] sm:$0xff]
        %v2228 = vld [vmem:[%s2212 + $0x78] sm:$0xff]
        %v2229 = vld [vmem:[%s2212 + $0x80] sm:$0xff]
        %v2230 = vld [vmem:[%s2212 + $0x88] sm:$0xff]
        %v2231 = vld [vmem:[%s2212 + $0x90] sm:$0xff]
        %v2232 = vld [vmem:[%s2212 + $0x98] sm:$0xff]
        %v2233 = vld [vmem:[%s2212 + $0xa0] sm:$0xff]
        %v2234 = vld [vmem:[%s2212 + $0xa8] sm:$0xff]
        %v2235 = vld [vmem:[%s2212 + $0xb0] sm:$0xff]
        %v2236 = vld [vmem:[%s2212 + $0xb8] sm:$0xff]
        %v2237 = vld [vmem:[%s2212 + $0xc0] sm:$0xff]
        %v2238 = vld [vmem:[%s2212 + $0xc8] sm:$0xff]
        %v2239 = vld [vmem:[%s2212 + $0xd0] sm:$0xff]
        %v2240 = vld [vmem:[%s2212 + $0xd8] sm:$0xff]
        %v2241 = vld [vmem:[%s2212 + $0xe0] sm:$0xff]
        %v2242 = vld [vmem:[%s2212 + $0xe8] sm:$0xff]
        %v2243 = vld [vmem:[%s2212 + $0xf0] sm:$0xff]
        %v2244 = vld [vmem:[%s2212 + $0xf8] sm:$0xff]
        %v2245 = vld [vmem:[%s2212 + $0x100] sm:$0xff]
        %v2246 = vld [vmem:[%s2212 + $0x108] sm:$0xff]
        %v2247 = vld [vmem:[%s2212 + $0x110] sm:$0xff]
        %v2248 = vld [vmem:[%s2212 + $0x118] sm:$0xff]
        %v2249 = vld [vmem:[%s2212 + $0x120] sm:$0xff]
        %v2250 = vld [vmem:[%s2212 + $0x128] sm:$0xff]
        %v2251 = vld [vmem:[%s2212 + $0x130] sm:$0xff]
        %v2252 = vld [vmem:[%s2212 + $0x138] sm:$0xff]
        %v2253 = vld [vmem:[%s2212 + $0x140] sm:$0xff]
        %v2254 = vld [vmem:[%s2212 + $0x148] sm:$0xff]
        %v2255 = vld [vmem:[%s2212 + $0x150] sm:$0xff]
        %v2256 = vld [vmem:[%s2212 + $0x158] sm:$0xff]
        %v2257 = vld [vmem:[%s2212 + $0x160] sm:$0xff]
        %v2258 = vld [vmem:[%s2212 + $0x168] sm:$0xff]
        %v2259 = vld [vmem:[%s2212 + $0x170] sm:$0xff]
        %v2260 = vld [vmem:[%s2212 + $0x178] sm:$0xff]
        %s2261 = scalar_lea.vmem %s5, 576
        %v2262 = vld [vmem:[%s2261] sm:$0xff]
        %v2263 = vld [vmem:[%s2261 + $0x8] sm:$0xff]
        %v2264 = vld [vmem:[%s2261 + $0x10] sm:$0xff]
        %v2265 = vld [vmem:[%s2261 + $0x18] sm:$0xff]
        %v2266 = vld [vmem:[%s2261 + $0x20] sm:$0xff]
        %v2267 = vld [vmem:[%s2261 + $0x28] sm:$0xff]
        %v2268 = vld [vmem:[%s2261 + $0x30] sm:$0xff]
        %v2269 = vld [vmem:[%s2261 + $0x38] sm:$0xff]
        %v2270 = vld [vmem:[%s2261 + $0x40] sm:$0xff]
        %v2271 = vld [vmem:[%s2261 + $0x48] sm:$0xff]
        %v2272 = vld [vmem:[%s2261 + $0x50] sm:$0xff]
        %v2273 = vld [vmem:[%s2261 + $0x58] sm:$0xff]
        %v2274 = vld [vmem:[%s2261 + $0x60] sm:$0xff]
        %v2275 = vld [vmem:[%s2261 + $0x68] sm:$0xff]
        %v2276 = vld [vmem:[%s2261 + $0x70] sm:$0xff]
        %v2277 = vld [vmem:[%s2261 + $0x78] sm:$0xff]
        %v2278 = vld [vmem:[%s2261 + $0x80] sm:$0xff]
        %v2279 = vld [vmem:[%s2261 + $0x88] sm:$0xff]
        %v2280 = vld [vmem:[%s2261 + $0x90] sm:$0xff]
        %v2281 = vld [vmem:[%s2261 + $0x98] sm:$0xff]
        %v2282 = vld [vmem:[%s2261 + $0xa0] sm:$0xff]
        %v2283 = vld [vmem:[%s2261 + $0xa8] sm:$0xff]
        %v2284 = vld [vmem:[%s2261 + $0xb0] sm:$0xff]
        %v2285 = vld [vmem:[%s2261 + $0xb8] sm:$0xff]
        %2287 = vset.pattern.permute.xlu0 0
        %2288 = vperm.xlu0 %2287, %v2262
        %v2289 = vpop.permute.xlu0 %2288
        %2292 = vset.pattern.permute.xlu0 0
        %2293 = vperm.xlu0 %2292, %v2263
        %v2294 = vpop.permute.xlu0 %2293
        %2297 = vset.pattern.permute.xlu0 0
        %2298 = vperm.xlu0 %2297, %v2264
        %v2299 = vpop.permute.xlu0 %2298
        %2302 = vset.pattern.permute.xlu0 0
        %2303 = vperm.xlu0 %2302, %v2265
        %v2304 = vpop.permute.xlu0 %2303
        %2307 = vset.pattern.permute.xlu0 0
        %2308 = vperm.xlu0 %2307, %v2266
        %v2309 = vpop.permute.xlu0 %2308
        %2312 = vset.pattern.permute.xlu0 0
        %2313 = vperm.xlu0 %2312, %v2267
        %v2314 = vpop.permute.xlu0 %2313
        %2317 = vset.pattern.permute.xlu0 0
        %2318 = vperm.xlu0 %2317, %v2268
        %v2319 = vpop.permute.xlu0 %2318
        %2322 = vset.pattern.permute.xlu0 0
        %2323 = vperm.xlu0 %2322, %v2269
        %v2324 = vpop.permute.xlu0 %2323
        %2327 = vset.pattern.permute.xlu0 0
        %2328 = vperm.xlu0 %2327, %v2270
        %v2329 = vpop.permute.xlu0 %2328
        %2332 = vset.pattern.permute.xlu0 0
        %2333 = vperm.xlu0 %2332, %v2271
        %v2334 = vpop.permute.xlu0 %2333
        %2337 = vset.pattern.permute.xlu0 0
        %2338 = vperm.xlu0 %2337, %v2272
        %v2339 = vpop.permute.xlu0 %2338
        %2342 = vset.pattern.permute.xlu0 0
        %2343 = vperm.xlu0 %2342, %v2273
        %v2344 = vpop.permute.xlu0 %2343
        %2347 = vset.pattern.permute.xlu0 0
        %2348 = vperm.xlu0 %2347, %v2274
        %v2349 = vpop.permute.xlu0 %2348
        %2352 = vset.pattern.permute.xlu0 0
        %2353 = vperm.xlu0 %2352, %v2275
        %v2354 = vpop.permute.xlu0 %2353
        %2357 = vset.pattern.permute.xlu0 0
        %2358 = vperm.xlu0 %2357, %v2276
        %v2359 = vpop.permute.xlu0 %2358
        %2362 = vset.pattern.permute.xlu0 0
        %2363 = vperm.xlu0 %2362, %v2277
        %v2364 = vpop.permute.xlu0 %2363
        %2367 = vset.pattern.permute.xlu0 0
        %2368 = vperm.xlu0 %2367, %v2278
        %v2369 = vpop.permute.xlu0 %2368
        %2372 = vset.pattern.permute.xlu0 0
        %2373 = vperm.xlu0 %2372, %v2279
        %v2374 = vpop.permute.xlu0 %2373
        %2377 = vset.pattern.permute.xlu0 0
        %2378 = vperm.xlu0 %2377, %v2280
        %v2379 = vpop.permute.xlu0 %2378
        %2382 = vset.pattern.permute.xlu0 0
        %2383 = vperm.xlu0 %2382, %v2281
        %v2384 = vpop.permute.xlu0 %2383
        %2387 = vset.pattern.permute.xlu0 0
        %2388 = vperm.xlu0 %2387, %v2282
        %v2389 = vpop.permute.xlu0 %2388
        %2392 = vset.pattern.permute.xlu0 0
        %2393 = vperm.xlu0 %2392, %v2283
        %v2394 = vpop.permute.xlu0 %2393
        %2397 = vset.pattern.permute.xlu0 0
        %2398 = vperm.xlu0 %2397, %v2284
        %v2399 = vpop.permute.xlu0 %2398
        %2402 = vset.pattern.permute.xlu0 0
        %2403 = vperm.xlu0 %2402, %v2285
        %v2404 = vpop.permute.xlu0 %2403
        %v2407 = vsel %vm980, %v2214, 0
        %v2410 = vsel %vm980, %v2216, 0
        %v2413 = vsel %vm980, %v2218, 0
        %v2416 = vsel %vm980, %v2220, 0
        %v2419 = vsel %vm980, %v2222, 0
        %v2422 = vsel %vm980, %v2224, 0
        %v2425 = vsel %vm980, %v2226, 0
        %v2428 = vsel %vm980, %v2228, 0
        %v2431 = vsel %vm980, %v2230, 0
        %v2434 = vsel %vm980, %v2232, 0
        %v2437 = vsel %vm980, %v2234, 0
        %v2440 = vsel %vm980, %v2236, 0
        %v2443 = vsel %vm980, %v2238, 0
        %v2446 = vsel %vm980, %v2240, 0
        %v2449 = vsel %vm980, %v2242, 0
        %v2452 = vsel %vm980, %v2244, 0
        %v2455 = vsel %vm980, %v2246, 0
        %v2458 = vsel %vm980, %v2248, 0
        %v2461 = vsel %vm980, %v2250, 0
        %v2464 = vsel %vm980, %v2252, 0
        %v2467 = vsel %vm980, %v2254, 0
        %v2470 = vsel %vm980, %v2256, 0
        %v2473 = vsel %vm980, %v2258, 0
        %v2476 = vsel %vm980, %v2260, 0
        %2478 = vmatprep.subr.mxu0 0.0
        %2479 = vmatpush1.msra.mxu0 %v2188
        %2480 = vmatprep.subr.mxu0 0.0
        %2481 = vmatpush1.msra.mxu0 %v2189
        %2482 = vmatprep.subr.mxu0 0.0
        %2483 = vmatpush1.msra.mxu0 %v2190
        %2484 = vmatprep.subr.mxu0 0.0
        %2485 = vmatpush1.msra.mxu0 %v2191
        %2486 = vmatprep.subr.mxu0 0.0
        %2487 = vmatpush1.msra.mxu0 %v2192
        %2488 = vmatprep.subr.mxu0 0.0
        %2489 = vmatpush1.msra.mxu0 %v2193
        %2490 = vmatprep.subr.mxu0 0.0
        %2491 = vmatpush1.msra.mxu0 %v2194
        %2492 = vmatprep.subr.mxu0 0.0
        %2493 = vmatpush1.msra.mxu0 %v2195
        %2494 = vmatprep.subr.mxu0 0.0
        %2495 = vmatpush1.msra.mxu0 %v2196
        %2496 = vmatprep.subr.mxu0 0.0
        %2497 = vmatpush1.msra.mxu0 %v2197
        %2498 = vmatprep.subr.mxu0 0.0
        %2499 = vmatpush1.msra.mxu0 %v2198
        %2500 = vmatprep.subr.mxu0 0.0
        %2501 = vmatpush1.msra.mxu0 %v2199
        %2502 = vmatprep.subr.mxu0 0.0
        %2503 = vmatpush1.msra.mxu0 %v2200
        %2504 = vmatprep.subr.mxu0 0.0
        %2505 = vmatpush1.msra.mxu0 %v2201
        %2506 = vmatprep.subr.mxu0 0.0
        %2507 = vmatpush1.msra.mxu0 %v2202
        %2508 = vmatprep.subr.mxu0 0.0
        %2509 = vmatpush1.msra.mxu0 %v2203
        %2510 = vmatprep.subr.mxu0 0.0
        %2511 = vmatpush1.msra.mxu0 %v2204
        %2512 = vmatprep.subr.mxu0 0.0
        %2513 = vmatpush1.msra.mxu0 %v2205
        %2514 = vmatprep.subr.mxu0 0.0
        %2515 = vmatpush1.msra.mxu0 %v2206
        %2516 = vmatprep.subr.mxu0 0.0
        %2517 = vmatpush1.msra.mxu0 %v2207
        %2518 = vmatprep.subr.mxu0 0.0
        %2519 = vmatpush1.msra.mxu0 %v2208
        %2520 = vmatprep.subr.mxu0 0.0
        %2521 = vmatpush1.msra.mxu0 %v2209
        %2522 = vmatprep.subr.mxu0 0.0
        %2523 = vmatpush1.msra.mxu0 %v2210
        %2524 = vmatprep.subr.mxu0 0.0
        %2525 = vmatpush1.msra.mxu0 %v2211
        %2526 = vmatprep.subr.mxu0 0.0
        %2527 = vmatpush1.msra.mxu0 0.0
        %2528 = vmatprep.subr.mxu0 0.0
        %2529 = vmatpush1.msra.mxu0 0.0
        %2530 = vmatprep.subr.mxu0 0.0
        %2531 = vmatpush1.msra.mxu0 0.0
        %2532 = vmatprep.subr.mxu0 0.0
        %2533 = vmatpush1.msra.mxu0 0.0
        %2534 = vmatprep.subr.mxu0 0.0
        %2535 = vmatpush1.msra.mxu0 0.0
        %2536 = vmatprep.subr.mxu0 0.0
        %2537 = vmatpush1.msra.mxu0 0.0
        %2538 = vmatprep.subr.mxu0 0.0
        %2539 = vmatpush1.msra.mxu0 0.0
        %2540 = vmatprep.subr.mxu0 0.0
        %2541 = vmatpush1.msra.mxu0 0.0
        %2542 = vmatprep.mubr.f32.mxu0 %v2407
        %2543 = vmatmul.mubr.f32.gmra.mrb[0].mxu0 %v2213
        %v2544 = vpop.f32.mrb[0].mxu0
        %v2545 = vadd.f32 %v2289, %v2544
        %v2546 = vpop.f32.mrb[0].mxu0
        %2547 = vmatprep.mubr.f32.mxu0 %v2410
        %2548 = vmatmul.mubr.f32.gmra.mrb[0].mxu0 %v2215
        %v2549 = vpop.f32.mrb[0].mxu0
        %v2550 = vadd.f32 %v2294, %v2549
        %v2551 = vpop.f32.mrb[0].mxu0
        %2552 = vmatprep.mubr.f32.mxu0 %v2413
        %2553 = vmatmul.mubr.f32.gmra.mrb[0].mxu0 %v2217
        %v2554 = vpop.f32.mrb[0].mxu0
        %v2555 = vadd.f32 %v2299, %v2554
        %v2556 = vpop.f32.mrb[0].mxu0
        %2557 = vmatprep.mubr.f32.mxu0 %v2416
        %2558 = vmatmul.mubr.f32.gmra.mrb[0].mxu0 %v2219
        %v2559 = vpop.f32.mrb[0].mxu0
        %v2560 = vadd.f32 %v2304, %v2559
        %v2561 = vpop.f32.mrb[0].mxu0
        %2562 = vmatprep.mubr.f32.mxu0 %v2419
        %2563 = vmatmul.mubr.f32.gmra.mrb[0].mxu0 %v2221
        %v2564 = vpop.f32.mrb[0].mxu0
        %v2565 = vadd.f32 %v2309, %v2564
        %v2566 = vpop.f32.mrb[0].mxu0
        %2567 = vmatprep.mubr.f32.mxu0 %v2422
        %2568 = vmatmul.mubr.f32.gmra.mrb[0].mxu0 %v2223
        %v2569 = vpop.f32.mrb[0].mxu0
        %v2570 = vadd.f32 %v2314, %v2569
        %v2571 = vpop.f32.mrb[0].mxu0
        %2572 = vmatprep.mubr.f32.mxu0 %v2425
        %2573 = vmatmul.mubr.f32.gmra.mrb[0].mxu0 %v2225
        %v2574 = vpop.f32.mrb[0].mxu0
        %v2575 = vadd.f32 %v2319, %v2574
        %v2576 = vpop.f32.mrb[0].mxu0
        %2577 = vmatprep.mubr.f32.mxu0 %v2428
        %2578 = vmatmul.mubr.f32.gmra.mrb[0].mxu0 %v2227
        %v2579 = vpop.f32.mrb[0].mxu0
        %v2580 = vadd.f32 %v2324, %v2579
        %v2581 = vpop.f32.mrb[0].mxu0
        %2582 = vmatprep.mubr.f32.mxu0 %v2431
        %2583 = vmatmul.mubr.f32.gmra.mrb[0].mxu0 %v2229
        %v2584 = vpop.f32.mrb[0].mxu0
        %v2585 = vadd.f32 %v2329, %v2584
        %v2586 = vpop.f32.mrb[0].mxu0
        %2587 = vmatprep.mubr.f32.mxu0 %v2434
        %2588 = vmatmul.mubr.f32.gmra.mrb[0].mxu0 %v2231
        %v2589 = vpop.f32.mrb[0].mxu0
        %v2590 = vadd.f32 %v2334, %v2589
        %v2591 = vpop.f32.mrb[0].mxu0
        %2592 = vmatprep.mubr.f32.mxu0 %v2437
        %2593 = vmatmul.mubr.f32.gmra.mrb[0].mxu0 %v2233
        %v2594 = vpop.f32.mrb[0].mxu0
        %v2595 = vadd.f32 %v2339, %v2594
        %v2596 = vpop.f32.mrb[0].mxu0
        %2597 = vmatprep.mubr.f32.mxu0 %v2440
        %2598 = vmatmul.mubr.f32.gmra.mrb[0].mxu0 %v2235
        %v2599 = vpop.f32.mrb[0].mxu0
        %v2600 = vadd.f32 %v2344, %v2599
        %v2601 = vpop.f32.mrb[0].mxu0
        %2602 = vmatprep.mubr.f32.mxu0 %v2443
        %2603 = vmatmul.mubr.f32.gmra.mrb[0].mxu0 %v2237
        %v2604 = vpop.f32.mrb[0].mxu0
        %v2605 = vadd.f32 %v2349, %v2604
        %v2606 = vpop.f32.mrb[0].mxu0
        %2607 = vmatprep.mubr.f32.mxu0 %v2446
        %2608 = vmatmul.mubr.f32.gmra.mrb[0].mxu0 %v2239
        %v2609 = vpop.f32.mrb[0].mxu0
        %v2610 = vadd.f32 %v2354, %v2609
        %v2611 = vpop.f32.mrb[0].mxu0
        %2612 = vmatprep.mubr.f32.mxu0 %v2449
        %2613 = vmatmul.mubr.f32.gmra.mrb[0].mxu0 %v2241
        %v2614 = vpop.f32.mrb[0].mxu0
        %v2615 = vadd.f32 %v2359, %v2614
        %v2616 = vpop.f32.mrb[0].mxu0
        %2617 = vmatprep.mubr.f32.mxu0 %v2452
        %2618 = vmatmul.mubr.f32.gmra.mrb[0].mxu0 %v2243
        %v2619 = vpop.f32.mrb[0].mxu0
        %v2620 = vadd.f32 %v2364, %v2619
        %v2621 = vpop.f32.mrb[0].mxu0
        %2622 = vmatprep.mubr.f32.mxu0 %v2455
        %2623 = vmatmul.mubr.f32.gmra.mrb[0].mxu0 %v2245
        %v2624 = vpop.f32.mrb[0].mxu0
        %v2625 = vadd.f32 %v2369, %v2624
        %v2626 = vpop.f32.mrb[0].mxu0
        %2627 = vmatprep.mubr.f32.mxu0 %v2458
        %2628 = vmatmul.mubr.f32.gmra.mrb[0].mxu0 %v2247
        %v2629 = vpop.f32.mrb[0].mxu0
        %v2630 = vadd.f32 %v2374, %v2629
        %v2631 = vpop.f32.mrb[0].mxu0
        %2632 = vmatprep.mubr.f32.mxu0 %v2461
        %2633 = vmatmul.mubr.f32.gmra.mrb[0].mxu0 %v2249
        %v2634 = vpop.f32.mrb[0].mxu0
        %v2635 = vadd.f32 %v2379, %v2634
        %v2636 = vpop.f32.mrb[0].mxu0
        %2637 = vmatprep.mubr.f32.mxu0 %v2464
        %2638 = vmatmul.mubr.f32.gmra.mrb[0].mxu0 %v2251
        %v2639 = vpop.f32.mrb[0].mxu0
        %v2640 = vadd.f32 %v2384, %v2639
        %v2641 = vpop.f32.mrb[0].mxu0
        %2642 = vmatprep.mubr.f32.mxu0 %v2467
        %2643 = vmatmul.mubr.f32.gmra.mrb[0].mxu0 %v2253
        %v2644 = vpop.f32.mrb[0].mxu0
        %v2645 = vadd.f32 %v2389, %v2644
        %v2646 = vpop.f32.mrb[0].mxu0
        %2647 = vmatprep.mubr.f32.mxu0 %v2470
        %2648 = vmatmul.mubr.f32.gmra.mrb[0].mxu0 %v2255
        %v2649 = vpop.f32.mrb[0].mxu0
        %v2650 = vadd.f32 %v2394, %v2649
        %v2651 = vpop.f32.mrb[0].mxu0
        %2652 = vmatprep.mubr.f32.mxu0 %v2473
        %2653 = vmatmul.mubr.f32.gmra.mrb[0].mxu0 %v2257
        %v2654 = vpop.f32.mrb[0].mxu0
        %v2655 = vadd.f32 %v2399, %v2654
        %v2656 = vpop.f32.mrb[0].mxu0
        %2657 = vmatprep.mubr.f32.mxu0 %v2476
        %2658 = vmatmul.mubr.f32.gmra.mrb[0].mxu0 %v2259
        %v2659 = vpop.f32.mrb[0].mxu0
        %v2660 = vadd.f32 %v2404, %v2659
        %v2661 = vpop.f32.mrb[0].mxu0
        %2662 = vdwg.mxu0
        %v2663 = vtanh.pop %v2545
        %v2664 = vtanh.pop %v2550
        %v2665 = vtanh.pop %v2555
        %v2666 = vtanh.pop %v2560
        %v2667 = vtanh.pop %v2565
        %v2668 = vtanh.pop %v2570
        %v2669 = vtanh.pop %v2575
        %v2670 = vtanh.pop %v2580
        %v2671 = vtanh.pop %v2585
        %v2672 = vtanh.pop %v2590
        %v2673 = vtanh.pop %v2595
        %v2674 = vtanh.pop %v2600
        %v2675 = vtanh.pop %v2605
        %v2676 = vtanh.pop %v2610
        %v2677 = vtanh.pop %v2615
        %v2678 = vtanh.pop %v2620
        %v2679 = vtanh.pop %v2625
        %v2680 = vtanh.pop %v2630
        %v2681 = vtanh.pop %v2635
        %v2682 = vtanh.pop %v2640
        %v2683 = vtanh.pop %v2645
        %v2684 = vtanh.pop %v2650
        %v2685 = vtanh.pop %v2655
        %v2686 = vtanh.pop %v2660
        %v2687 = vld [vmem:[%s6] sm:$0x77]
        %v2688 = vld [vmem:[%s7] sm:$0x7]
        %2690 = vset.pattern.permute.xlu0 0
        %2691 = vperm.xlu0 %2690, %v2688
        %v2692 = vpop.permute.xlu0 %2691
        %v2695 = vcombine.high %v2687, %v2687
        %v2696 = vsel %vm980, %v2695, 0
        %2698 = vmatprep.subr.mxu0 0.0
        %2699 = vmatpush1.msra.mxu0 %v2663
        %2700 = vmatprep.subr.mxu0 0.0
        %2701 = vmatpush1.msra.mxu0 %v2664
        %2702 = vmatprep.subr.mxu0 0.0
        %2703 = vmatpush1.msra.mxu0 %v2665
        %2704 = vmatprep.subr.mxu0 0.0
        %2705 = vmatpush1.msra.mxu0 %v2666
        %2706 = vmatprep.subr.mxu0 0.0
        %2707 = vmatpush1.msra.mxu0 %v2667
        %2708 = vmatprep.subr.mxu0 0.0
        %2709 = vmatpush1.msra.mxu0 %v2668
        %2710 = vmatprep.subr.mxu0 0.0
        %2711 = vmatpush1.msra.mxu0 %v2669
        %2712 = vmatprep.subr.mxu0 0.0
        %2713 = vmatpush1.msra.mxu0 %v2670
        %2714 = vmatprep.subr.mxu0 0.0
        %2715 = vmatpush1.msra.mxu0 %v2671
        %2716 = vmatprep.subr.mxu0 0.0
        %2717 = vmatpush1.msra.mxu0 %v2672
        %2718 = vmatprep.subr.mxu0 0.0
        %2719 = vmatpush1.msra.mxu0 %v2673
        %2720 = vmatprep.subr.mxu0 0.0
        %2721 = vmatpush1.msra.mxu0 %v2674
        %2722 = vmatprep.subr.mxu0 0.0
        %2723 = vmatpush1.msra.mxu0 %v2675
        %2724 = vmatprep.subr.mxu0 0.0
        %2725 = vmatpush1.msra.mxu0 %v2676
        %2726 = vmatprep.subr.mxu0 0.0
        %2727 = vmatpush1.msra.mxu0 %v2677
        %2728 = vmatprep.subr.mxu0 0.0
        %2729 = vmatpush1.msra.mxu0 %v2678
        %2730 = vmatprep.subr.mxu0 0.0
        %2731 = vmatpush1.msra.mxu0 %v2679
        %2732 = vmatprep.subr.mxu0 0.0
        %2733 = vmatpush1.msra.mxu0 %v2680
        %2734 = vmatprep.subr.mxu0 0.0
        %2735 = vmatpush1.msra.mxu0 %v2681
        %2736 = vmatprep.subr.mxu0 0.0
        %2737 = vmatpush1.msra.mxu0 %v2682
        %2738 = vmatprep.subr.mxu0 0.0
        %2739 = vmatpush1.msra.mxu0 %v2683
        %2740 = vmatprep.subr.mxu0 0.0
        %2741 = vmatpush1.msra.mxu0 %v2684
        %2742 = vmatprep.subr.mxu0 0.0
        %2743 = vmatpush1.msra.mxu0 %v2685
        %2744 = vmatprep.subr.mxu0 0.0
        %2745 = vmatpush1.msra.mxu0 %v2686
        %2746 = vmatprep.subr.mxu0 0.0
        %2747 = vmatpush1.msra.mxu0 0.0
        %2748 = vmatprep.subr.mxu0 0.0
        %2749 = vmatpush1.msra.mxu0 0.0
        %2750 = vmatprep.subr.mxu0 0.0
        %2751 = vmatpush1.msra.mxu0 0.0
        %2752 = vmatprep.subr.mxu0 0.0
        %2753 = vmatpush1.msra.mxu0 0.0
        %2754 = vmatprep.subr.mxu0 0.0
        %2755 = vmatpush1.msra.mxu0 0.0
        %2756 = vmatprep.subr.mxu0 0.0
        %2757 = vmatpush1.msra.mxu0 0.0
        %2758 = vmatprep.subr.mxu0 0.0
        %2759 = vmatpush1.msra.mxu0 0.0
        %2760 = vmatprep.subr.mxu0 0.0
        %2761 = vmatpush1.msra.mxu0 0.0
        %2762 = vmatprep.mubr.f32.mxu0 %v2696
        %2763 = vmatmul.mubr.f32.gmra.mrb[0].mxu0 %v2687
        %v2764 = vpop.f32.mrb[0].mxu0
        %v2765 = vadd.f32 %v2692, %v2764
        %v2766 = vpop.f32.mrb[0].mxu0
        %2767 = vdwg.mxu0
        %v2768 = vld [vmem:[%s332] sm:$0x7]
        %2769 = vst [vmem:[%s324] sm:$0x7] %v2768
        %2770 = vst [vmem:[%s324 + $0x3] sm:$0x7] %v2765
        %s2771 = sand.u32 %s209, 1
        %s2772 = scalar_lea.sflag [#allocation4], %s2771
        %s2773 = sand.u32 %s209, 1
        %s2774 = smul.addr %s2773, 8
        %s2775 = scalar_lea.vmem [#allocation5], %s2774
        // Predicated region
        $region57: #{tpu_custom_call.1} parent=51 // pred_check
          %p2776 = pneg %p219
        $region58: #{tpu_custom_call.1} parent=51 // pred_check_branch
          %2778 = sbr.rel (%p2776) target = $region60
        $region59: #{tpu_custom_call.1} parent=51 // pred_region
          %s2780 = ssub.s32 128, 128
          %2781 = vsyncadd %s2772, %s2780
          %s2782 = smul.addr %s23, 128
          %s2783 = scalar_lea.hbm %s8, %s2782
          %s2785 = sshll.u32 %s2775, 4
          %s2786 = int_to_ptr.vmem [resolvable:$true] %s2785
          %2788 = dma.vmem_to_hbm [thread:$0]  %s2786, 128, %s2783, %s2772
        $region60: #{tpu_custom_call.1} parent=51 // pred_fallthru
          _
      $region52: #{tpu_custom_call.1} parent=5 // pred_fallthru
        _
      %p2789 = scmp.le.s32.totalorder 2, %s18
      // Predicated region
      $region61: #{tpu_custom_call.1} parent=5 // pred_check
        %p2790 = pneg %p2789
      $region62: #{tpu_custom_call.1} parent=5 // pred_check_branch
        %2792 = sbr.rel (%p2790) target = $region64
      $region63: #{tpu_custom_call.1} parent=5 // pred_region
        %s2793 = ssub.s32 %s18, 2
        // Predicated region
        $region65: #{tpu_custom_call.1} parent=63 // pred_check
          %p2794 = pneg %p225
        $region66: #{tpu_custom_call.1} parent=63 // pred_check_branch
          %2796 = sbr.rel (%p2794) target = $region68
        $region67: #{tpu_custom_call.1} parent=63 // pred_region
          %s2797 = sand.u32 %s210, 1
          %s2798 = scalar_lea.sflag [#allocation4], %s2797
          %s2799 = sand.u32 %s210, 1
          %s2800 = smul.addr %s2799, 8
          %s2801 = scalar_lea.vmem [#allocation5], %s2800
          %2802 = dma.done %s2798, 128
        $region68: #{tpu_custom_call.1} parent=63 // pred_fallthru
          _
      $region64: #{tpu_custom_call.1} parent=5 // pred_fallthru
        _
    $region6: #{tpu_custom_call.1} parent=1 // loop_footer
      %s22 = sadd.s32 1, %s18
    $region7: #{tpu_custom_call.1} parent=1 // loop_footer_branch
      %17 = sbr.rel target = $region3
    $region8: #{tpu_custom_call.1} parent=1 // loop_exit
      _
    %2803 = vsyncpa [#allocation3], 1
    %s2804 = scalar_lea.sflag [#allocation3], 1
    %2805 = vsyncpa %s2804, 1
    %2806 = vsyncpa [#allocation4], 1
    %s2807 = scalar_lea.sflag [#allocation4], 1
    %2808 = vsyncpa %s2807, 1

</llo_original>
